<compile_context>
chip_gen: v7x
topology: tpu7x:2x2x1
jax: 0.10.0
libtpu: 0.0.40
codegen_flags: <defaults>
</compile_context>

<pallas_src>
import functools

import jax
import jax.numpy as jnp
from jax import lax
from jax.experimental import pallas as pl
from jax.experimental.pallas import tpu as pltpu


def _mha_kernel(q_ref, k_ref, v_ref,
                wqt_ref, wkt_ref, wvt_ref, wot_ref, bo_ref,
                out_ref, attn_ref,
                kproj_ref, vproj_ref,
                *, num_heads, head_dim):
    f32 = jnp.float32
    bf16 = jnp.bfloat16

    # --- K/V projections: computed once per batch.  The query-tile axis is the
    #     inner ("arbitrary") grid axis, so this scratch stays resident and
    #     valid for every query tile of the current batch element.
    @pl.when(pl.program_id(1) == 0)
    def _():
        kproj_ref[...] = jnp.dot(k_ref[0], wkt_ref[...],
                                 preferred_element_type=f32)              # (T, D) f32
        vproj_ref[...] = jnp.dot(v_ref[0], wvt_ref[...],
                                 preferred_element_type=f32).astype(bf16)  # (T, D) bf16

    # --- Q projection for this query tile: all heads in one MXU matmul.
    q_all = jnp.dot(q_ref[0], wqt_ref[...], preferred_element_type=f32)   # (TL, D) f32
    k_all = kproj_ref[...]                                                 # (T, D) f32
    v_all = vproj_ref[...]                                                 # (T, D) bf16

    scale = 1.0 / jnp.sqrt(f32(head_dim))
    contract_last = (((1,), (1,)), ((), ()))

    # Per-head scaled-dot-product attention.  Heads are unrolled in Python
    # (H is small); per-head results stay in registers and are stored once as
    # lane-dense slabs below instead of per-head partial stores.
    attn_heads = []
    o_heads = []
    for h in range(num_heads):
        sl = slice(h * head_dim, (h + 1) * head_dim)
        qh = q_all[:, sl]                                                  # (TL, dk) f32
        kh = k_all[:, sl]                                                  # (T,  dk) f32

        # energy = q_h @ k_h^T / sqrt(dk); softmax path kept in f32 (VPU/EUP).
        energy = lax.dot_general(qh, kh, contract_last,
                                 preferred_element_type=f32) * scale       # (TL, T)
        m = jnp.max(energy, axis=-1, keepdims=True)
        e = jnp.exp(energy - m)
        attn = e * pl.reciprocal(jnp.sum(e, axis=-1, keepdims=True), approx=True)
        attn_heads.append(attn)

        # o_h = attn @ v_h, f32 accumulation; kept in registers.
        o_heads.append(jnp.dot(attn.astype(bf16), v_all[:, sl],
                               preferred_element_type=f32))                # (TL, dk)

    # Single store of the attention map (all heads at once).
    attn_ref[0] = jnp.stack(attn_heads, axis=0).astype(attn_ref.dtype)     # (H, TL, T)

    # Concatenate head outputs into one (TL, D) slab and do ONE fused fc_out
    # matmul (full-K contraction) + bias add; single lane-dense output store.
    o_cat = jnp.concatenate(o_heads, axis=-1).astype(bf16)                 # (TL, D)
    out = jnp.dot(o_cat, wot_ref[...], preferred_element_type=f32) + bo_ref[...]
    out_ref[0] = out.astype(out_ref.dtype)


def multi_head_attention(query, key, value, wq, wk, wv, wo, bo, *,
                         num_heads, q_tile=128):
    """query/key/value: [B, L|T, D]. Weights follow PyTorch Linear convention
    (weight shape = (out_features, in_features), y = x @ W^T + b)."""
    B, L, D = query.shape
    T = key.shape[1]
    dk = D // num_heads
    assert dk * num_heads == D, "hidden_dim must be divisible by num_heads"

    # Query-axis tiling (one tile at the small test shapes).
    TL = L if L <= q_tile else q_tile
    assert L % TL == 0 and (TL == L or TL % 8 == 0)
    num_l = L // TL

    bf16 = jnp.bfloat16
    # PyTorch Linear computes y = x @ W^T; pre-transpose AND pre-cast to bf16
    # once in the wrapper: halves weight DMA / VMEM residency and removes the
    # 4*D^2 cast ops that were re-executed every grid step.
    wqt = wq.T.astype(bf16)
    wkt = wk.T.astype(bf16)
    wvt = wv.T.astype(bf16)
    wot = wo.T.astype(bf16)
    bo2 = bo.reshape(1, D).astype(jnp.float32)   # bias added in f32 post-accumulation
    q_bf = query.astype(bf16)
    k_bf = key.astype(bf16)
    v_bf = value.astype(bf16)

    kernel = functools.partial(_mha_kernel, num_heads=num_heads, head_dim=dk)

    out, attn = pl.pallas_call(
        kernel,
        out_shape=(
            jax.ShapeDtypeStruct((B, L, D), jnp.float32),
            jax.ShapeDtypeStruct((B, num_heads, L, T), jnp.float32),
        ),
        grid_spec=pltpu.PrefetchScalarGridSpec(
            num_scalar_prefetch=0,
            grid=(B, num_l),
            in_specs=[
                pl.BlockSpec((1, TL, D), lambda b, l: (b, l, 0)),   # query tile
                pl.BlockSpec((1, T, D), lambda b, l: (b, 0, 0)),    # key   (full T, per batch)
                pl.BlockSpec((1, T, D), lambda b, l: (b, 0, 0)),    # value (full T, per batch)
                pl.BlockSpec((D, D), lambda b, l: (0, 0)),          # W_q^T bf16 (DMA'd once)
                pl.BlockSpec((D, D), lambda b, l: (0, 0)),          # W_k^T bf16
                pl.BlockSpec((D, D), lambda b, l: (0, 0)),          # W_v^T bf16
                pl.BlockSpec((D, D), lambda b, l: (0, 0)),          # W_out^T bf16
                pl.BlockSpec((1, D), lambda b, l: (0, 0)),          # fc_out bias f32
            ],
            out_specs=[
                pl.BlockSpec((1, TL, D), lambda b, l: (b, l, 0)),               # out
                pl.BlockSpec((1, num_heads, TL, T), lambda b, l: (b, 0, l, 0)), # attention
            ],
            scratch_shapes=[
                pltpu.VMEM((T, D), jnp.float32),   # projected K (resident per batch)
                pltpu.VMEM((T, D), bf16),          # projected V (resident per batch)
            ],
        ),
        compiler_params=pltpu.CompilerParams(
            # Batch axis is megacore-parallel; query-tile axis must be
            # sequential ("arbitrary") so the K/V projection computed at l == 0
            # stays valid for the remaining tiles of the same batch element.
            dimension_semantics=("parallel", "arbitrary"),
            vmem_limit_bytes=64 * 1024 * 1024,
        ),
    )(q_bf, k_bf, v_bf, wqt, wkt, wvt, wot, bo2)
    return out, attn


def reference_mha(query, key, value, wq, wk, wv, wo, bo, *, num_heads):
    B, L, D = query.shape
    T = key.shape[1]
    dk = D // num_heads
    q = (query @ wq.T).reshape(B, L, num_heads, dk).transpose(0, 2, 1, 3)
    k = (key @ wk.T).reshape(B, T, num_heads, dk).transpose(0, 2, 1, 3)
    v = (value @ wv.T).reshape(B, T, num_heads, dk).transpose(0, 2, 1, 3)
    energy = jnp.einsum('bhlk,bhtk->bhlt', q, k) / jnp.sqrt(jnp.float32(dk))
    attn = jax.nn.softmax(energy, axis=-1)
    o = jnp.einsum('bhlt,bhtv->bhlv', attn, v)
    o = o.transpose(0, 2, 1, 3).reshape(B, L, D)
    out = o @ wo.T + bo
    return out, attn


if __name__ == "__main__":
    B, L, T, D, H = 2, 8, 8, 64, 8   # hidden_dim=64, num_heads=8 -> head_dim=8
    key0 = jax.random.PRNGKey(0)
    kq, kk, kv, kwq, kwk, kwv, kwo, kbo = jax.random.split(key0, 8)

    # The module's _init_weights uses std = sqrt(hidden + hidden/heads) ~ 8.5 for
    # the Q/K/V projections; keep that, but scale the inputs down so the softmax
    # energies stay O(1) and the bf16-MXU kernel vs f32 reference comparison is
    # numerically meaningful.
    query = 0.01 * jax.random.normal(kq, (B, L, D), dtype=jnp.float32)
    keyx  = 0.01 * jax.random.normal(kk, (B, T, D), dtype=jnp.float32)
    value = 0.01 * jax.random.normal(kv, (B, T, D), dtype=jnp.float32)

    std_qkv = jnp.sqrt(jnp.float32(D + D // H))          # normal_(std=sqrt(hidden + hidden/heads))
    wq = std_qkv * jax.random.normal(kwq, (D, D), dtype=jnp.float32)
    wk = std_qkv * jax.random.normal(kwk, (D, D), dtype=jnp.float32)
    wv = std_qkv * jax.random.normal(kwv, (D, D), dtype=jnp.float32)
    std_xavier = jnp.sqrt(jnp.float32(2.0 / (D + D)))    # xavier_normal_
    wo = std_xavier * jax.random.normal(kwo, (D, D), dtype=jnp.float32)
    bound = 1.0 / jnp.sqrt(jnp.float32(D))               # default Linear bias init
    bo = jax.random.uniform(kbo, (D,), minval=-bound, maxval=bound, dtype=jnp.float32)

    out, attn = multi_head_attention(query, keyx, value, wq, wk, wv, wo, bo, num_heads=H)
    out = jax.block_until_ready(out)
    attn = jax.block_until_ready(attn)

    out_ref, attn_ref = reference_mha(query, keyx, value, wq, wk, wv, wo, bo, num_heads=H)
    assert out.shape == (B, L, D) and attn.shape == (B, H, L, T)
    assert jnp.allclose(attn, attn_ref, rtol=2e-2, atol=2e-2), "attention mismatch"
    assert jnp.allclose(out, out_ref, rtol=2e-2, atol=2e-2), "output mismatch"

    print("KERNEL_OK")
</pallas_src>

<mosaic_0001>
module attributes {stable_mosaic.version = 11 : i64} {
  func.func @_mha_kernel(%arg0: i32, %arg1: i32, %arg2: memref<1x8x64xbf16, #tpu.memory_space<vmem>>, %arg3: memref<1x8x64xbf16, #tpu.memory_space<vmem>>, %arg4: memref<1x8x64xbf16, #tpu.memory_space<vmem>>, %arg5: memref<64x64xbf16, #tpu.memory_space<vmem>>, %arg6: memref<64x64xbf16, #tpu.memory_space<vmem>>, %arg7: memref<64x64xbf16, #tpu.memory_space<vmem>>, %arg8: memref<64x64xbf16, #tpu.memory_space<vmem>>, %arg9: memref<1x64xf32, #tpu.memory_space<vmem>>, %arg10: memref<1x8x64xf32, #tpu.memory_space<vmem>>, %arg11: memref<1x8x8x8xf32, #tpu.memory_space<vmem>>, %arg12: memref<8x64xf32, #tpu.memory_space<vmem>>, %arg13: memref<8x64xbf16, #tpu.memory_space<vmem>>) attributes {dimension_semantics = [#tpu.dimension_semantics<parallel>, #tpu.dimension_semantics<arbitrary>], iteration_bounds = array<i64: 2, 1>, scalar_prefetch = 0 : i64, scratch_operands = 2 : i64, tpu.core_type = #tpu.core_type<tc>, window_params = [{transform_indices = @transform_0, window_bounds = array<i64: 1, 8, 64>}, {transform_indices = @transform_1, window_bounds = array<i64: 1, 8, 64>}, {transform_indices = @transform_2, window_bounds = array<i64: 1, 8, 64>}, {pipeline_mode = #tpu.pipeline_mode<synchronous>, transform_indices = @transform_3, window_bounds = array<i64: 64, 64>}, {pipeline_mode = #tpu.pipeline_mode<synchronous>, transform_indices = @transform_4, window_bounds = array<i64: 64, 64>}, {pipeline_mode = #tpu.pipeline_mode<synchronous>, transform_indices = @transform_5, window_bounds = array<i64: 64, 64>}, {pipeline_mode = #tpu.pipeline_mode<synchronous>, transform_indices = @transform_6, window_bounds = array<i64: 64, 64>}, {pipeline_mode = #tpu.pipeline_mode<synchronous>, transform_indices = @transform_7, window_bounds = array<i64: 1, 64>}, {transform_indices = @transform_8, window_bounds = array<i64: 1, 8, 64>}, {transform_indices = @transform_9, window_bounds = array<i64: 1, 8, 8, 8>}]} {
    %c0_i32 = arith.constant 0 : i32
    %0 = arith.cmpi eq, %arg1, %c0_i32 : i32
    %1 = arith.extui %0 : i1 to i32
    %c0_i32_0 = arith.constant 0 : i32
    %2 = arith.cmpi ne, %1, %c0_i32_0 : i32
    scf.if %2 {
      %c0_55 = arith.constant 0 : index
      %c0_56 = arith.constant 0 : index
      %c0_57 = arith.constant 0 : index
      %177 = vector.load %arg3[%c0_55, %c0_56, %c0_57] : memref<1x8x64xbf16, #tpu.memory_space<vmem>>, vector<1x8x64xbf16>
      %178 = vector.shape_cast %177 : vector<1x8x64xbf16> to vector<8x64xbf16>
      %c0_58 = arith.constant 0 : index
      %c0_59 = arith.constant 0 : index
      %179 = vector.load %arg6[%c0_58, %c0_59] : memref<64x64xbf16, #tpu.memory_space<vmem>>, vector<64x64xbf16>
      %cst_60 = arith.constant dense<0.000000e+00> : vector<8x64xf32>
      %180 = tpu.matmul %178, %179, %cst_60 {dimension_numbers = #tpu.dot_dimension_numbers<[1], [0], [0], [1], [0, 0, 1, 1], [], []>} : vector<8x64xbf16>, vector<64x64xbf16>, vector<8x64xf32> -> vector<8x64xf32>
      %c0_61 = arith.constant 0 : index
      %c0_62 = arith.constant 0 : index
      %181 = vector.load %arg12[%c0_61, %c0_62] : memref<8x64xf32, #tpu.memory_space<vmem>>, vector<8x64xf32>
      tpu.vector_store %arg12[%c0_61, %c0_62], %180 {strides = array<i32>} : memref<8x64xf32, #tpu.memory_space<vmem>>, vector<8x64xf32>,
      %c0_63 = arith.constant 0 : index
      %c0_64 = arith.constant 0 : index
      %c0_65 = arith.constant 0 : index
      %182 = vector.load %arg4[%c0_63, %c0_64, %c0_65] : memref<1x8x64xbf16, #tpu.memory_space<vmem>>, vector<1x8x64xbf16>
      %183 = vector.shape_cast %182 : vector<1x8x64xbf16> to vector<8x64xbf16>
      %c0_66 = arith.constant 0 : index
      %c0_67 = arith.constant 0 : index
      %184 = vector.load %arg7[%c0_66, %c0_67] : memref<64x64xbf16, #tpu.memory_space<vmem>>, vector<64x64xbf16>
      %cst_68 = arith.constant dense<0.000000e+00> : vector<8x64xf32>
      %185 = tpu.matmul %183, %184, %cst_68 {dimension_numbers = #tpu.dot_dimension_numbers<[1], [0], [0], [1], [0, 0, 1, 1], [], []>} : vector<8x64xbf16>, vector<64x64xbf16>, vector<8x64xf32> -> vector<8x64xf32>
      %186 = arith.truncf %185 : vector<8x64xf32> to vector<8x64xbf16>
      %c0_69 = arith.constant 0 : index
      %c0_70 = arith.constant 0 : index
      %187 = vector.load %arg13[%c0_69, %c0_70] : memref<8x64xbf16, #tpu.memory_space<vmem>>, vector<8x64xbf16>
      tpu.vector_store %arg13[%c0_69, %c0_70], %186 {strides = array<i32>} : memref<8x64xbf16, #tpu.memory_space<vmem>>, vector<8x64xbf16>,
    } else {
    }
    %c0 = arith.constant 0 : index
    %c0_1 = arith.constant 0 : index
    %c0_2 = arith.constant 0 : index
    %3 = vector.load %arg2[%c0, %c0_1, %c0_2] : memref<1x8x64xbf16, #tpu.memory_space<vmem>>, vector<1x8x64xbf16>
    %4 = vector.shape_cast %3 : vector<1x8x64xbf16> to vector<8x64xbf16>
    %c0_3 = arith.constant 0 : index
    %c0_4 = arith.constant 0 : index
    %5 = vector.load %arg5[%c0_3, %c0_4] : memref<64x64xbf16, #tpu.memory_space<vmem>>, vector<64x64xbf16>
    %cst = arith.constant dense<0.000000e+00> : vector<8x64xf32>
    %6 = tpu.matmul %4, %5, %cst {dimension_numbers = #tpu.dot_dimension_numbers<[1], [0], [0], [1], [0, 0, 1, 1], [], []>} : vector<8x64xbf16>, vector<64x64xbf16>, vector<8x64xf32> -> vector<8x64xf32>
    %c0_5 = arith.constant 0 : index
    %c0_6 = arith.constant 0 : index
    %7 = vector.load %arg12[%c0_5, %c0_6] : memref<8x64xf32, #tpu.memory_space<vmem>>, vector<8x64xf32>
    %c0_7 = arith.constant 0 : index
    %c0_8 = arith.constant 0 : index
    %8 = vector.load %arg13[%c0_7, %c0_8] : memref<8x64xbf16, #tpu.memory_space<vmem>>, vector<8x64xbf16>
    %cst_9 = arith.constant 8.000000e+00 : f32
    %9 = math.sqrt %cst_9 : f32
    %cst_10 = arith.constant 1.000000e+00 : f32
    %10 = arith.divf %cst_10, %9 : f32
    %11 = vector.extract_strided_slice %6 {offsets = [0, 0], sizes = [8, 8], strides = [1, 1]} : vector<8x64xf32> to vector<8x8xf32>
    %12 = vector.extract_strided_slice %7 {offsets = [0, 0], sizes = [8, 8], strides = [1, 1]} : vector<8x64xf32> to vector<8x8xf32>
    %cst_11 = arith.constant dense<0.000000e+00> : vector<8x8xf32>
    %13 = tpu.matmul %11, %12, %cst_11 {dimension_numbers = #tpu.dot_dimension_numbers<[1], [1], [0], [0], [0, 0, 1, 0], [], []>} : vector<8x8xf32>, vector<8x8xf32>, vector<8x8xf32> -> vector<8x8xf32>
    %14 = vector.broadcast %10 : f32 to vector<8x8xf32>
    %15 = arith.mulf %13, %14 : vector<8x8xf32>
    %cst_12 = arith.constant dense<0xFF800000> : vector<8xf32>
    %16 = vector.multi_reduction <maximumf>, %15, %cst_12 [1] : vector<8x8xf32> to vector<8xf32>
    %17 = vector.shape_cast %16 : vector<8xf32> to vector<8x1xf32>
    %18 = vector.broadcast %17 : vector<8x1xf32> to vector<8x8xf32>
    %19 = arith.subf %15, %18 : vector<8x8xf32>
    %20 = math.exp %19 : vector<8x8xf32>
    %cst_13 = arith.constant dense<0.000000e+00> : vector<8xf32>
    %21 = vector.multi_reduction <add>, %20, %cst_13 [1] : vector<8x8xf32> to vector<8xf32>
    %22 = vector.shape_cast %21 : vector<8xf32> to vector<8x1xf32>
    %23 = tpu.reciprocal %22 {approx = true} : vector<8x1xf32> -> vector<8x1xf32>
    %24 = vector.broadcast %23 : vector<8x1xf32> to vector<8x8xf32>
    %25 = arith.mulf %20, %24 : vector<8x8xf32>
    %26 = arith.truncf %25 : vector<8x8xf32> to vector<8x8xbf16>
    %27 = vector.extract_strided_slice %8 {offsets = [0, 0], sizes = [8, 8], strides = [1, 1]} : vector<8x64xbf16> to vector<8x8xbf16>
    %cst_14 = arith.constant dense<0.000000e+00> : vector<8x8xf32>
    %28 = tpu.matmul %26, %27, %cst_14 {dimension_numbers = #tpu.dot_dimension_numbers<[1], [0], [0], [1], [0, 0, 1, 1], [], []>} : vector<8x8xbf16>, vector<8x8xbf16>, vector<8x8xf32> -> vector<8x8xf32>
    %29 = vector.extract_strided_slice %6 {offsets = [0, 8], sizes = [8, 8], strides = [1, 1]} : vector<8x64xf32> to vector<8x8xf32>
    %30 = vector.extract_strided_slice %7 {offsets = [0, 8], sizes = [8, 8], strides = [1, 1]} : vector<8x64xf32> to vector<8x8xf32>
    %cst_15 = arith.constant dense<0.000000e+00> : vector<8x8xf32>
    %31 = tpu.matmul %29, %30, %cst_15 {dimension_numbers = #tpu.dot_dimension_numbers<[1], [1], [0], [0], [0, 0, 1, 0], [], []>} : vector<8x8xf32>, vector<8x8xf32>, vector<8x8xf32> -> vector<8x8xf32>
    %32 = vector.broadcast %10 : f32 to vector<8x8xf32>
    %33 = arith.mulf %31, %32 : vector<8x8xf32>
    %cst_16 = arith.constant dense<0xFF800000> : vector<8xf32>
    %34 = vector.multi_reduction <maximumf>, %33, %cst_16 [1] : vector<8x8xf32> to vector<8xf32>
    %35 = vector.shape_cast %34 : vector<8xf32> to vector<8x1xf32>
    %36 = vector.broadcast %35 : vector<8x1xf32> to vector<8x8xf32>
    %37 = arith.subf %33, %36 : vector<8x8xf32>
    %38 = math.exp %37 : vector<8x8xf32>
    %cst_17 = arith.constant dense<0.000000e+00> : vector<8xf32>
    %39 = vector.multi_reduction <add>, %38, %cst_17 [1] : vector<8x8xf32> to vector<8xf32>
    %40 = vector.shape_cast %39 : vector<8xf32> to vector<8x1xf32>
    %41 = tpu.reciprocal %40 {approx = true} : vector<8x1xf32> -> vector<8x1xf32>
    %42 = vector.broadcast %41 : vector<8x1xf32> to vector<8x8xf32>
    %43 = arith.mulf %38, %42 : vector<8x8xf32>
    %44 = arith.truncf %43 : vector<8x8xf32> to vector<8x8xbf16>
    %45 = vector.extract_strided_slice %8 {offsets = [0, 8], sizes = [8, 8], strides = [1, 1]} : vector<8x64xbf16> to vector<8x8xbf16>
    %cst_18 = arith.constant dense<0.000000e+00> : vector<8x8xf32>
    %46 = tpu.matmul %44, %45, %cst_18 {dimension_numbers = #tpu.dot_dimension_numbers<[1], [0], [0], [1], [0, 0, 1, 1], [], []>} : vector<8x8xbf16>, vector<8x8xbf16>, vector<8x8xf32> -> vector<8x8xf32>
    %47 = vector.extract_strided_slice %6 {offsets = [0, 16], sizes = [8, 8], strides = [1, 1]} : vector<8x64xf32> to vector<8x8xf32>
    %48 = vector.extract_strided_slice %7 {offsets = [0, 16], sizes = [8, 8], strides = [1, 1]} : vector<8x64xf32> to vector<8x8xf32>
    %cst_19 = arith.constant dense<0.000000e+00> : vector<8x8xf32>
    %49 = tpu.matmul %47, %48, %cst_19 {dimension_numbers = #tpu.dot_dimension_numbers<[1], [1], [0], [0], [0, 0, 1, 0], [], []>} : vector<8x8xf32>, vector<8x8xf32>, vector<8x8xf32> -> vector<8x8xf32>
    %50 = vector.broadcast %10 : f32 to vector<8x8xf32>
    %51 = arith.mulf %49, %50 : vector<8x8xf32>
    %cst_20 = arith.constant dense<0xFF800000> : vector<8xf32>
    %52 = vector.multi_reduction <maximumf>, %51, %cst_20 [1] : vector<8x8xf32> to vector<8xf32>
    %53 = vector.shape_cast %52 : vector<8xf32> to vector<8x1xf32>
    %54 = vector.broadcast %53 : vector<8x1xf32> to vector<8x8xf32>
    %55 = arith.subf %51, %54 : vector<8x8xf32>
    %56 = math.exp %55 : vector<8x8xf32>
    %cst_21 = arith.constant dense<0.000000e+00> : vector<8xf32>
    %57 = vector.multi_reduction <add>, %56, %cst_21 [1] : vector<8x8xf32> to vector<8xf32>
    %58 = vector.shape_cast %57 : vector<8xf32> to vector<8x1xf32>
    %59 = tpu.reciprocal %58 {approx = true} : vector<8x1xf32> -> vector<8x1xf32>
    %60 = vector.broadcast %59 : vector<8x1xf32> to vector<8x8xf32>
    %61 = arith.mulf %56, %60 : vector<8x8xf32>
    %62 = arith.truncf %61 : vector<8x8xf32> to vector<8x8xbf16>
    %63 = vector.extract_strided_slice %8 {offsets = [0, 16], sizes = [8, 8], strides = [1, 1]} : vector<8x64xbf16> to vector<8x8xbf16>
    %cst_22 = arith.constant dense<0.000000e+00> : vector<8x8xf32>
    %64 = tpu.matmul %62, %63, %cst_22 {dimension_numbers = #tpu.dot_dimension_numbers<[1], [0], [0], [1], [0, 0, 1, 1], [], []>} : vector<8x8xbf16>, vector<8x8xbf16>, vector<8x8xf32> -> vector<8x8xf32>
    %65 = vector.extract_strided_slice %6 {offsets = [0, 24], sizes = [8, 8], strides = [1, 1]} : vector<8x64xf32> to vector<8x8xf32>
    %66 = vector.extract_strided_slice %7 {offsets = [0, 24], sizes = [8, 8], strides = [1, 1]} : vector<8x64xf32> to vector<8x8xf32>
    %cst_23 = arith.constant dense<0.000000e+00> : vector<8x8xf32>
    %67 = tpu.matmul %65, %66, %cst_23 {dimension_numbers = #tpu.dot_dimension_numbers<[1], [1], [0], [0], [0, 0, 1, 0], [], []>} : vector<8x8xf32>, vector<8x8xf32>, vector<8x8xf32> -> vector<8x8xf32>
    %68 = vector.broadcast %10 : f32 to vector<8x8xf32>
    %69 = arith.mulf %67, %68 : vector<8x8xf32>
    %cst_24 = arith.constant dense<0xFF800000> : vector<8xf32>
    %70 = vector.multi_reduction <maximumf>, %69, %cst_24 [1] : vector<8x8xf32> to vector<8xf32>
    %71 = vector.shape_cast %70 : vector<8xf32> to vector<8x1xf32>
    %72 = vector.broadcast %71 : vector<8x1xf32> to vector<8x8xf32>
    %73 = arith.subf %69, %72 : vector<8x8xf32>
    %74 = math.exp %73 : vector<8x8xf32>
    %cst_25 = arith.constant dense<0.000000e+00> : vector<8xf32>
    %75 = vector.multi_reduction <add>, %74, %cst_25 [1] : vector<8x8xf32> to vector<8xf32>
    %76 = vector.shape_cast %75 : vector<8xf32> to vector<8x1xf32>
    %77 = tpu.reciprocal %76 {approx = true} : vector<8x1xf32> -> vector<8x1xf32>
    %78 = vector.broadcast %77 : vector<8x1xf32> to vector<8x8xf32>
    %79 = arith.mulf %74, %78 : vector<8x8xf32>
    %80 = arith.truncf %79 : vector<8x8xf32> to vector<8x8xbf16>
    %81 = vector.extract_strided_slice %8 {offsets = [0, 24], sizes = [8, 8], strides = [1, 1]} : vector<8x64xbf16> to vector<8x8xbf16>
    %cst_26 = arith.constant dense<0.000000e+00> : vector<8x8xf32>
    %82 = tpu.matmul %80, %81, %cst_26 {dimension_numbers = #tpu.dot_dimension_numbers<[1], [0], [0], [1], [0, 0, 1, 1], [], []>} : vector<8x8xbf16>, vector<8x8xbf16>, vector<8x8xf32> -> vector<8x8xf32>
    %83 = vector.extract_strided_slice %6 {offsets = [0, 32], sizes = [8, 8], strides = [1, 1]} : vector<8x64xf32> to vector<8x8xf32>
    %84 = vector.extract_strided_slice %7 {offsets = [0, 32], sizes = [8, 8], strides = [1, 1]} : vector<8x64xf32> to vector<8x8xf32>
    %cst_27 = arith.constant dense<0.000000e+00> : vector<8x8xf32>
    %85 = tpu.matmul %83, %84, %cst_27 {dimension_numbers = #tpu.dot_dimension_numbers<[1], [1], [0], [0], [0, 0, 1, 0], [], []>} : vector<8x8xf32>, vector<8x8xf32>, vector<8x8xf32> -> vector<8x8xf32>
    %86 = vector.broadcast %10 : f32 to vector<8x8xf32>
    %87 = arith.mulf %85, %86 : vector<8x8xf32>
    %cst_28 = arith.constant dense<0xFF800000> : vector<8xf32>
    %88 = vector.multi_reduction <maximumf>, %87, %cst_28 [1] : vector<8x8xf32> to vector<8xf32>
    %89 = vector.shape_cast %88 : vector<8xf32> to vector<8x1xf32>
    %90 = vector.broadcast %89 : vector<8x1xf32> to vector<8x8xf32>
    %91 = arith.subf %87, %90 : vector<8x8xf32>
    %92 = math.exp %91 : vector<8x8xf32>
    %cst_29 = arith.constant dense<0.000000e+00> : vector<8xf32>
    %93 = vector.multi_reduction <add>, %92, %cst_29 [1] : vector<8x8xf32> to vector<8xf32>
    %94 = vector.shape_cast %93 : vector<8xf32> to vector<8x1xf32>
    %95 = tpu.reciprocal %94 {approx = true} : vector<8x1xf32> -> vector<8x1xf32>
    %96 = vector.broadcast %95 : vector<8x1xf32> to vector<8x8xf32>
    %97 = arith.mulf %92, %96 : vector<8x8xf32>
    %98 = arith.truncf %97 : vector<8x8xf32> to vector<8x8xbf16>
    %99 = vector.extract_strided_slice %8 {offsets = [0, 32], sizes = [8, 8], strides = [1, 1]} : vector<8x64xbf16> to vector<8x8xbf16>
    %cst_30 = arith.constant dense<0.000000e+00> : vector<8x8xf32>
    %100 = tpu.matmul %98, %99, %cst_30 {dimension_numbers = #tpu.dot_dimension_numbers<[1], [0], [0], [1], [0, 0, 1, 1], [], []>} : vector<8x8xbf16>, vector<8x8xbf16>, vector<8x8xf32> -> vector<8x8xf32>
    %101 = vector.extract_strided_slice %6 {offsets = [0, 40], sizes = [8, 8], strides = [1, 1]} : vector<8x64xf32> to vector<8x8xf32>
    %102 = vector.extract_strided_slice %7 {offsets = [0, 40], sizes = [8, 8], strides = [1, 1]} : vector<8x64xf32> to vector<8x8xf32>
    %cst_31 = arith.constant dense<0.000000e+00> : vector<8x8xf32>
    %103 = tpu.matmul %101, %102, %cst_31 {dimension_numbers = #tpu.dot_dimension_numbers<[1], [1], [0], [0], [0, 0, 1, 0], [], []>} : vector<8x8xf32>, vector<8x8xf32>, vector<8x8xf32> -> vector<8x8xf32>
    %104 = vector.broadcast %10 : f32 to vector<8x8xf32>
    %105 = arith.mulf %103, %104 : vector<8x8xf32>
    %cst_32 = arith.constant dense<0xFF800000> : vector<8xf32>
    %106 = vector.multi_reduction <maximumf>, %105, %cst_32 [1] : vector<8x8xf32> to vector<8xf32>
    %107 = vector.shape_cast %106 : vector<8xf32> to vector<8x1xf32>
    %108 = vector.broadcast %107 : vector<8x1xf32> to vector<8x8xf32>
    %109 = arith.subf %105, %108 : vector<8x8xf32>
    %110 = math.exp %109 : vector<8x8xf32>
    %cst_33 = arith.constant dense<0.000000e+00> : vector<8xf32>
    %111 = vector.multi_reduction <add>, %110, %cst_33 [1] : vector<8x8xf32> to vector<8xf32>
    %112 = vector.shape_cast %111 : vector<8xf32> to vector<8x1xf32>
    %113 = tpu.reciprocal %112 {approx = true} : vector<8x1xf32> -> vector<8x1xf32>
    %114 = vector.broadcast %113 : vector<8x1xf32> to vector<8x8xf32>
    %115 = arith.mulf %110, %114 : vector<8x8xf32>
    %116 = arith.truncf %115 : vector<8x8xf32> to vector<8x8xbf16>
    %117 = vector.extract_strided_slice %8 {offsets = [0, 40], sizes = [8, 8], strides = [1, 1]} : vector<8x64xbf16> to vector<8x8xbf16>
    %cst_34 = arith.constant dense<0.000000e+00> : vector<8x8xf32>
    %118 = tpu.matmul %116, %117, %cst_34 {dimension_numbers = #tpu.dot_dimension_numbers<[1], [0], [0], [1], [0, 0, 1, 1], [], []>} : vector<8x8xbf16>, vector<8x8xbf16>, vector<8x8xf32> -> vector<8x8xf32>
    %119 = vector.extract_strided_slice %6 {offsets = [0, 48], sizes = [8, 8], strides = [1, 1]} : vector<8x64xf32> to vector<8x8xf32>
    %120 = vector.extract_strided_slice %7 {offsets = [0, 48], sizes = [8, 8], strides = [1, 1]} : vector<8x64xf32> to vector<8x8xf32>
    %cst_35 = arith.constant dense<0.000000e+00> : vector<8x8xf32>
    %121 = tpu.matmul %119, %120, %cst_35 {dimension_numbers = #tpu.dot_dimension_numbers<[1], [1], [0], [0], [0, 0, 1, 0], [], []>} : vector<8x8xf32>, vector<8x8xf32>, vector<8x8xf32> -> vector<8x8xf32>
    %122 = vector.broadcast %10 : f32 to vector<8x8xf32>
    %123 = arith.mulf %121, %122 : vector<8x8xf32>
    %cst_36 = arith.constant dense<0xFF800000> : vector<8xf32>
    %124 = vector.multi_reduction <maximumf>, %123, %cst_36 [1] : vector<8x8xf32> to vector<8xf32>
    %125 = vector.shape_cast %124 : vector<8xf32> to vector<8x1xf32>
    %126 = vector.broadcast %125 : vector<8x1xf32> to vector<8x8xf32>
    %127 = arith.subf %123, %126 : vector<8x8xf32>
    %128 = math.exp %127 : vector<8x8xf32>
    %cst_37 = arith.constant dense<0.000000e+00> : vector<8xf32>
    %129 = vector.multi_reduction <add>, %128, %cst_37 [1] : vector<8x8xf32> to vector<8xf32>
    %130 = vector.shape_cast %129 : vector<8xf32> to vector<8x1xf32>
    %131 = tpu.reciprocal %130 {approx = true} : vector<8x1xf32> -> vector<8x1xf32>
    %132 = vector.broadcast %131 : vector<8x1xf32> to vector<8x8xf32>
    %133 = arith.mulf %128, %132 : vector<8x8xf32>
    %134 = arith.truncf %133 : vector<8x8xf32> to vector<8x8xbf16>
    %135 = vector.extract_strided_slice %8 {offsets = [0, 48], sizes = [8, 8], strides = [1, 1]} : vector<8x64xbf16> to vector<8x8xbf16>
    %cst_38 = arith.constant dense<0.000000e+00> : vector<8x8xf32>
    %136 = tpu.matmul %134, %135, %cst_38 {dimension_numbers = #tpu.dot_dimension_numbers<[1], [0], [0], [1], [0, 0, 1, 1], [], []>} : vector<8x8xbf16>, vector<8x8xbf16>, vector<8x8xf32> -> vector<8x8xf32>
    %137 = vector.extract_strided_slice %6 {offsets = [0, 56], sizes = [8, 8], strides = [1, 1]} : vector<8x64xf32> to vector<8x8xf32>
    %138 = vector.extract_strided_slice %7 {offsets = [0, 56], sizes = [8, 8], strides = [1, 1]} : vector<8x64xf32> to vector<8x8xf32>
    %cst_39 = arith.constant dense<0.000000e+00> : vector<8x8xf32>
    %139 = tpu.matmul %137, %138, %cst_39 {dimension_numbers = #tpu.dot_dimension_numbers<[1], [1], [0], [0], [0, 0, 1, 0], [], []>} : vector<8x8xf32>, vector<8x8xf32>, vector<8x8xf32> -> vector<8x8xf32>
    %140 = vector.broadcast %10 : f32 to vector<8x8xf32>
    %141 = arith.mulf %139, %140 : vector<8x8xf32>
    %cst_40 = arith.constant dense<0xFF800000> : vector<8xf32>
    %142 = vector.multi_reduction <maximumf>, %141, %cst_40 [1] : vector<8x8xf32> to vector<8xf32>
    %143 = vector.shape_cast %142 : vector<8xf32> to vector<8x1xf32>
    %144 = vector.broadcast %143 : vector<8x1xf32> to vector<8x8xf32>
    %145 = arith.subf %141, %144 : vector<8x8xf32>
    %146 = math.exp %145 : vector<8x8xf32>
    %cst_41 = arith.constant dense<0.000000e+00> : vector<8xf32>
    %147 = vector.multi_reduction <add>, %146, %cst_41 [1] : vector<8x8xf32> to vector<8xf32>
    %148 = vector.shape_cast %147 : vector<8xf32> to vector<8x1xf32>
    %149 = tpu.reciprocal %148 {approx = true} : vector<8x1xf32> -> vector<8x1xf32>
    %150 = vector.broadcast %149 : vector<8x1xf32> to vector<8x8xf32>
    %151 = arith.mulf %146, %150 : vector<8x8xf32>
    %152 = arith.truncf %151 : vector<8x8xf32> to vector<8x8xbf16>
    %153 = vector.extract_strided_slice %8 {offsets = [0, 56], sizes = [8, 8], strides = [1, 1]} : vector<8x64xbf16> to vector<8x8xbf16>
    %cst_42 = arith.constant dense<0.000000e+00> : vector<8x8xf32>
    %154 = tpu.matmul %152, %153, %cst_42 {dimension_numbers = #tpu.dot_dimension_numbers<[1], [0], [0], [1], [0, 0, 1, 1], [], []>} : vector<8x8xbf16>, vector<8x8xbf16>, vector<8x8xf32> -> vector<8x8xf32>
    %155 = vector.shape_cast %25 : vector<8x8xf32> to vector<1x8x8xf32>
    %156 = vector.shape_cast %43 : vector<8x8xf32> to vector<1x8x8xf32>
    %157 = vector.shape_cast %61 : vector<8x8xf32> to vector<1x8x8xf32>
    %158 = vector.shape_cast %79 : vector<8x8xf32> to vector<1x8x8xf32>
    %159 = vector.shape_cast %97 : vector<8x8xf32> to vector<1x8x8xf32>
    %160 = vector.shape_cast %115 : vector<8x8xf32> to vector<1x8x8xf32>
    %161 = vector.shape_cast %133 : vector<8x8xf32> to vector<1x8x8xf32>
    %162 = vector.shape_cast %151 : vector<8x8xf32> to vector<1x8x8xf32>
    %163 = tpu.concatenate %155, %156, %157, %158, %159, %160, %161, %162 in 0 : vector<1x8x8xf32>, vector<1x8x8xf32>, vector<1x8x8xf32>, vector<1x8x8xf32>, vector<1x8x8xf32>, vector<1x8x8xf32>, vector<1x8x8xf32>, vector<1x8x8xf32> -> vector<8x8x8xf32>
    %c0_43 = arith.constant 0 : index
    %c0_44 = arith.constant 0 : index
    %c0_45 = arith.constant 0 : index
    %c0_46 = arith.constant 0 : index
    %164 = vector.load %arg11[%c0_43, %c0_44, %c0_45, %c0_46] : memref<1x8x8x8xf32, #tpu.memory_space<vmem>>, vector<1x8x8x8xf32>
    %165 = vector.shape_cast %164 : vector<1x8x8x8xf32> to vector<8x8x8xf32>
    %166 = vector.shape_cast %163 : vector<8x8x8xf32> to vector<1x8x8x8xf32>
    tpu.vector_store %arg11[%c0_43, %c0_44, %c0_45, %c0_46], %166 {strides = array<i32>} : memref<1x8x8x8xf32, #tpu.memory_space<vmem>>, vector<1x8x8x8xf32>,
    %167 = tpu.concatenate %28, %46, %64, %82, %100, %118, %136, %154 in 1 : vector<8x8xf32>, vector<8x8xf32>, vector<8x8xf32>, vector<8x8xf32>, vector<8x8xf32>, vector<8x8xf32>, vector<8x8xf32>, vector<8x8xf32> -> vector<8x64xf32>
    %168 = arith.truncf %167 : vector<8x64xf32> to vector<8x64xbf16>
    %c0_47 = arith.constant 0 : index
    %c0_48 = arith.constant 0 : index
    %169 = vector.load %arg8[%c0_47, %c0_48] : memref<64x64xbf16, #tpu.memory_space<vmem>>, vector<64x64xbf16>
    %cst_49 = arith.constant dense<0.000000e+00> : vector<8x64xf32>
    %170 = tpu.matmul %168, %169, %cst_49 {dimension_numbers = #tpu.dot_dimension_numbers<[1], [0], [0], [1], [0, 0, 1, 1], [], []>} : vector<8x64xbf16>, vector<64x64xbf16>, vector<8x64xf32> -> vector<8x64xf32>
    %c0_50 = arith.constant 0 : index
    %c0_51 = arith.constant 0 : index
    %171 = vector.load %arg9[%c0_50, %c0_51] : memref<1x64xf32, #tpu.memory_space<vmem>>, vector<1x64xf32>
    %172 = vector.broadcast %171 : vector<1x64xf32> to vector<8x64xf32>
    %173 = arith.addf %170, %172 : vector<8x64xf32>
    %c0_52 = arith.constant 0 : index
    %c0_53 = arith.constant 0 : index
    %c0_54 = arith.constant 0 : index
    %174 = vector.load %arg10[%c0_52, %c0_53, %c0_54] : memref<1x8x64xf32, #tpu.memory_space<vmem>>, vector<1x8x64xf32>
    %175 = vector.shape_cast %174 : vector<1x8x64xf32> to vector<8x64xf32>
    %176 = vector.shape_cast %173 : vector<8x64xf32> to vector<1x8x64xf32>
    tpu.vector_store %arg10[%c0_52, %c0_53, %c0_54], %176 {strides = array<i32>} : memref<1x8x64xf32, #tpu.memory_space<vmem>>, vector<1x8x64xf32>,
    return
  }
  func.func @transform_0(%arg0: i32, %arg1: i32) -> (i32, i32, i32) {
    %c0_i32 = arith.constant 0 : i32
    %c0_i32_0 = arith.constant 0 : i32
    return %arg0, %arg1, %c0_i32 : i32, i32, i32
  }
  func.func @transform_1(%arg0: i32, %arg1: i32) -> (i32, i32, i32) {
    %c0_i32 = arith.constant 0 : i32
    %c0_i32_0 = arith.constant 0 : i32
    %c0_i32_1 = arith.constant 0 : i32
    return %arg0, %c0_i32, %c0_i32_0 : i32, i32, i32
  }
  func.func @transform_2(%arg0: i32, %arg1: i32) -> (i32, i32, i32) {
    %c0_i32 = arith.constant 0 : i32
    %c0_i32_0 = arith.constant 0 : i32
    %c0_i32_1 = arith.constant 0 : i32
    return %arg0, %c0_i32, %c0_i32_0 : i32, i32, i32
  }
  func.func @transform_3(%arg0: i32, %arg1: i32) -> (i32, i32) {
    %c0_i32 = arith.constant 0 : i32
    %c0_i32_0 = arith.constant 0 : i32
    %c0_i32_1 = arith.constant 0 : i32
    return %c0_i32, %c0_i32_0 : i32, i32
  }
  func.func @transform_4(%arg0: i32, %arg1: i32) -> (i32, i32) {
    %c0_i32 = arith.constant 0 : i32
    %c0_i32_0 = arith.constant 0 : i32
    %c0_i32_1 = arith.constant 0 : i32
    return %c0_i32, %c0_i32_0 : i32, i32
  }
  func.func @transform_5(%arg0: i32, %arg1: i32) -> (i32, i32) {
    %c0_i32 = arith.constant 0 : i32
    %c0_i32_0 = arith.constant 0 : i32
    %c0_i32_1 = arith.constant 0 : i32
    return %c0_i32, %c0_i32_0 : i32, i32
  }
  func.func @transform_6(%arg0: i32, %arg1: i32) -> (i32, i32) {
    %c0_i32 = arith.constant 0 : i32
    %c0_i32_0 = arith.constant 0 : i32
    %c0_i32_1 = arith.constant 0 : i32
    return %c0_i32, %c0_i32_0 : i32, i32
  }
  func.func @transform_7(%arg0: i32, %arg1: i32) -> (i32, i32) {
    %c0_i32 = arith.constant 0 : i32
    %c0_i32_0 = arith.constant 0 : i32
    %c0_i32_1 = arith.constant 0 : i32
    return %c0_i32, %c0_i32_0 : i32, i32
  }
  func.func @transform_8(%arg0: i32, %arg1: i32) -> (i32, i32, i32) {
    %c0_i32 = arith.constant 0 : i32
    %c0_i32_0 = arith.constant 0 : i32
    return %arg0, %arg1, %c0_i32 : i32, i32, i32
  }
  func.func @transform_9(%arg0: i32, %arg1: i32) -> (i32, i32, i32, i32) {
    %c0_i32 = arith.constant 0 : i32
    %c0_i32_0 = arith.constant 0 : i32
    %c0_i32_1 = arith.constant 0 : i32
    return %arg0, %c0_i32, %arg1, %c0_i32_0 : i32, i32, i32, i32
  }
}

</mosaic_0001>

<llo_original>
// kernel: tpu_custom_call.1
$region0: #{tpu_custom_call.1}
  #allocation0 [shape = 'u32[]', space=smem, size = 0x4, offset = 0x4, fixed_abs, tag = 'smem constant byte address 0x4 - core index']
  #allocation1 [shape = 'u32[144,128]{1,0:T(1,128)}', space=vmem, size = 0x12000, scoped, tag = 'internal scratch']
  #allocation2 [shape = 'f32[8,64]{1,0:T(8,128)}', space=vmem, size = 0x1000, scoped, tag = 'scratch operand']
  #allocation3 [shape = 'bf16[8,64]{1,0:T(8,128)(2,1)}', space=vmem, size = 0x800, scoped, tag = 'scratch operand']
  %s0 = inlined_call_operand.hbm [shape: bf16[2,8,64], index: 0, kind: input, shape index: {}]
  %s1 = inlined_call_operand.hbm [shape: bf16[2,8,64], index: 1, kind: input, shape index: {}]
  %s2 = inlined_call_operand.hbm [shape: bf16[2,8,64], index: 2, kind: input, shape index: {}]
  %s3 = inlined_call_operand.hbm [shape: bf16[64,64], index: 3, kind: input, shape index: {}]
  %s4 = inlined_call_operand.hbm [shape: bf16[64,64], index: 4, kind: input, shape index: {}]
  %s5 = inlined_call_operand.hbm [shape: bf16[64,64], index: 5, kind: input, shape index: {}]
  %s6 = inlined_call_operand.hbm [shape: bf16[64,64], index: 6, kind: input, shape index: {}]
  %s7 = inlined_call_operand.hbm [shape: f32[1,64], index: 7, kind: input, shape index: {}]
  %s8 = inlined_call_operand.hbm [shape: f32[2,8,64], index: 8, kind: output, shape index: {0}]
  %s9 = inlined_call_operand.hbm [shape: f32[2,8,8,8], index: 9, kind: output, shape index: {1}]
  %10 = xla_tuple %s8, %s9
  %s11 = sld [smem:[#allocation0]]
  $region109: #{tpu_custom_call.1} parent=0
    _
  %s13 = ssub.s32 1, %s11
  %s14 = scalar_select 0, %s13, %s11
  $region1: #{tpu_custom_call.1} parent=0
    #allocation4 [shape = 'u8[4096]{0}', space=vmem, size = 0x1000, scoped, tag = 'input window, operand 0']
    #allocation5 [shape = 's32[2]{0}', space=sflag, size = 0x8, scoped, tag = 'scoped memory for tpu_custom_call.1']
    #allocation6 [shape = 's32[2]{0}', space=sflag, size = 0x8, scoped, tag = 'scoped memory for tpu_custom_call.1']
    #allocation7 [shape = 'u8[4096]{0}', space=vmem, size = 0x1000, scoped, tag = 'input window, operand 1']
    #allocation8 [shape = 's32[2]{0}', space=sflag, size = 0x8, scoped, tag = 'scoped memory for tpu_custom_call.1']
    #allocation9 [shape = 'u8[4096]{0}', space=vmem, size = 0x1000, scoped, tag = 'input window, operand 2']
    #allocation10 [shape = 'u8[16384]{0}', space=vmem, size = 0x4000, scoped, tag = 'input window, operand 3, single buffered']
    #allocation11 [shape = 's32[1]{0}', space=sflag, size = 0x4, scoped, tag = 'scoped memory for tpu_custom_call.1']
    #allocation12 [shape = 'u8[16384]{0}', space=vmem, size = 0x4000, scoped, tag = 'input window, operand 4, single buffered']
    #allocation13 [shape = 'u8[16384]{0}', space=vmem, size = 0x4000, scoped, tag = 'input window, operand 5, single buffered']
    #allocation14 [shape = 's32[1]{0}', space=sflag, size = 0x4, scoped, tag = 'scoped memory for tpu_custom_call.1']
    #allocation15 [shape = 'u8[16384]{0}', space=vmem, size = 0x4000, scoped, tag = 'input window, operand 6, single buffered']
    #allocation16 [shape = 'u8[512]{0}', space=vmem, size = 0x400, scoped, tag = 'input window, operand 7, single buffered']
    #allocation17 [shape = 's32[1]{0}', space=sflag, size = 0x4, scoped, tag = 'scoped memory for tpu_custom_call.1']
    #allocation18 [shape = 'u8[8192]{0}', space=vmem, size = 0x2000, scoped, tag = 'output window, operand 0']
    #allocation19 [shape = 'u8[65536]{0}', space=vmem, size = 0x10000, scoped, tag = 'output window, operand 1']
    #allocation20 [shape = 's32[2]{0}', space=sflag, size = 0x8, scoped, tag = 'scoped memory for tpu_custom_call.1']
    %15 = vsyncpa [#allocation5], 0
    %s16 = scalar_lea.sflag [#allocation5], 1
    %17 = vsyncpa %s16, 0
    %18 = vsyncpa [#allocation8], 0
    %s19 = scalar_lea.sflag [#allocation8], 1
    %20 = vsyncpa %s19, 0
    %21 = vsyncpa [#allocation11], 0
    %22 = vsyncpa [#allocation14], 0
    %23 = vsyncpa [#allocation17], 0
    %24 = vsyncpa [#allocation6], 0
    %s25 = scalar_lea.sflag [#allocation6], 1
    %26 = vsyncpa %s25, 0
    %27 = vsyncpa [#allocation20], 0
    %s28 = scalar_lea.sflag [#allocation20], 1
    %29 = vsyncpa %s28, 0
    loop: start=0, step=1, limit=4
    $region2: #{tpu_custom_call.1} parent=1 // loop_pre_header
      _
    $region3: #{tpu_custom_call.1} parent=1 // loop_header
      %s31 = sphi 0, %s35
      %p32 = scmp.ge.s32.totalorder %s31, 4
      %s38 = sphi 0, %s50
      %s39 = sphi 0, %s46
      %s40 = sphi 0, %s38
      %s41 = sphi 0, %s39
      %s42 = sphi 0, %s40
      %s43 = sphi 0, %s41
      %s55 = sphi 0, %s57
      %s58 = sphi 0, %s55
      %s59 = sphi 0, %s58
      %s75 = sphi 0, %s59
      %s81 = sphi 0, %s83
      %s84 = sphi 0, %s81
      %s85 = sphi 0, %s84
      %s101 = sphi 0, %s85
      %s107 = sphi 0, %s109
      %s110 = sphi 0, %s107
      %s111 = sphi 0, %s110
      %s127 = sphi 0, %s111
      %s131 = sphi 0, %s131
      %s133 = sphi 0, %s131
      %s134 = sphi 0, %s133
      %s148 = sphi 0, %s134
      %s152 = sphi 0, %s152
      %s154 = sphi 0, %s152
      %s155 = sphi 0, %s154
      %s169 = sphi 0, %s155
      %s173 = sphi 0, %s173
      %s175 = sphi 0, %s173
      %s176 = sphi 0, %s175
      %s190 = sphi 0, %s176
      %s194 = sphi 0, %s194
      %s196 = sphi 0, %s194
      %s197 = sphi 0, %s196
      %s211 = sphi 0, %s197
      %s215 = sphi 0, %s215
      %s217 = sphi 0, %s215
      %s218 = sphi 0, %s217
      %s232 = sphi 0, %s218
      %s240 = sphi 0, %s242
      %s243 = sphi 0, %s240
      %s244 = sphi 0, %s243
      %s260 = sphi 0, %s244
      %s268 = sphi 0, %s270
      %s271 = sphi 0, %s268
      %s272 = sphi 0, %s271
      %s288 = sphi 0, %s272
    $region4: #{tpu_custom_call.1} parent=1 // loop_header_branch
      %34 = sbr.rel (%p32) target = $region8
    $region5: #{tpu_custom_call.1} parent=1 // loop_body
      %s36 = ssub.s32 %s31, 1
      %s37 = ssub.s32 %s31, 2
      %s44 = sadd.s32 1, %s39
      %p45 = scmp.ge.s32.totalorder %s44, 1
      %s46 = scalar_select %p45, 0, %s44
      %s47 = sadd.s32 1, %s38
      %s48 = scalar_select %p45, %s47, %s38
      %p49 = scmp.ge.s32.totalorder %s48, 2
      %s50 = scalar_select %p49, 0, %s48
      %s51 = ssub.s32 %s38, %s50
      %s52 = ssub.s32 %s39, %s46
      %s53 = sor.u32 %s51, %s52
      %p54 = scmp.eq.s32.totalorder %s53, 0
      %s56 = sadd.s32 %s55, 1
      %s57 = scalar_select %p54, %s55, %s56
      %p60 = pneg %p54
      %p61 = scmp.eq.s32.totalorder %s31, 1
      %p62 = por %p60, %p61
      %p63 = scmp.ne.s32.totalorder %s55, %s58
      %p64 = scmp.eq.s32.totalorder %s31, 0
      %p65 = por %p63, %p64
      %p66 = scmp.ne.s32.totalorder %s55, %s58
      %p67 = scmp.eq.s32.totalorder %s36, 1
      %p68 = por %p66, %p67
      %p69 = scmp.ne.s32.totalorder %s58, %s59
      %p70 = scmp.eq.s32.totalorder %s36, 0
      %p71 = por %p69, %p70
      %p72 = scmp.ne.s32.totalorder %s58, %s59
      %p73 = scmp.eq.s32.totalorder %s37, 1
      %p74 = por %p72, %p73
      %p76 = scmp.ne.s32.totalorder %s59, %s75
      %p77 = scmp.eq.s32.totalorder %s37, 0
      %p78 = por %p76, %p77
      %s79 = ssub.s32 %s38, %s50
      %p80 = scmp.eq.s32.totalorder %s79, 0
      %s82 = sadd.s32 %s81, 1
      %s83 = scalar_select %p80, %s81, %s82
      %p86 = pneg %p80
      %p87 = scmp.eq.s32.totalorder %s31, 1
      %p88 = por %p86, %p87
      %p89 = scmp.ne.s32.totalorder %s81, %s84
      %p90 = scmp.eq.s32.totalorder %s31, 0
      %p91 = por %p89, %p90
      %p92 = scmp.ne.s32.totalorder %s81, %s84
      %p93 = scmp.eq.s32.totalorder %s36, 1
      %p94 = por %p92, %p93
      %p95 = scmp.ne.s32.totalorder %s84, %s85
      %p96 = scmp.eq.s32.totalorder %s36, 0
      %p97 = por %p95, %p96
      %p98 = scmp.ne.s32.totalorder %s84, %s85
      %p99 = scmp.eq.s32.totalorder %s37, 1
      %p100 = por %p98, %p99
      %p102 = scmp.ne.s32.totalorder %s85, %s101
      %p103 = scmp.eq.s32.totalorder %s37, 0
      %p104 = por %p102, %p103
      %s105 = ssub.s32 %s38, %s50
      %p106 = scmp.eq.s32.totalorder %s105, 0
      %s108 = sadd.s32 %s107, 1
      %s109 = scalar_select %p106, %s107, %s108
      %p112 = pneg %p106
      %p113 = scmp.eq.s32.totalorder %s31, 1
      %p114 = por %p112, %p113
      %p115 = scmp.ne.s32.totalorder %s107, %s110
      %p116 = scmp.eq.s32.totalorder %s31, 0
      %p117 = por %p115, %p116
      %p118 = scmp.ne.s32.totalorder %s107, %s110
      %p119 = scmp.eq.s32.totalorder %s36, 1
      %p120 = por %p118, %p119
      %p121 = scmp.ne.s32.totalorder %s110, %s111
      %p122 = scmp.eq.s32.totalorder %s36, 0
      %p123 = por %p121, %p122
      %p124 = scmp.ne.s32.totalorder %s110, %s111
      %p125 = scmp.eq.s32.totalorder %s37, 1
      %p126 = por %p124, %p125
      %p128 = scmp.ne.s32.totalorder %s111, %s127
      %p129 = scmp.eq.s32.totalorder %s37, 0
      %p130 = por %p128, %p129
      %s132 = sadd.s32 %s131, 1
      %p135 = scmp.eq.s32.totalorder %s31, 1
      %p136 = scmp.ne.s32.totalorder %s131, %s133
      %p137 = scmp.eq.s32.totalorder %s31, 0
      %p138 = por %p136, %p137
      %p139 = scmp.ne.s32.totalorder %s131, %s133
      %p140 = scmp.eq.s32.totalorder %s36, 1
      %p141 = por %p139, %p140
      %p142 = scmp.ne.s32.totalorder %s133, %s134
      %p143 = scmp.eq.s32.totalorder %s36, 0
      %p144 = por %p142, %p143
      %p145 = scmp.ne.s32.totalorder %s133, %s134
      %p146 = scmp.eq.s32.totalorder %s37, 1
      %p147 = por %p145, %p146
      %p149 = scmp.ne.s32.totalorder %s134, %s148
      %p150 = scmp.eq.s32.totalorder %s37, 0
      %p151 = por %p149, %p150
      %s153 = sadd.s32 %s152, 1
      %p156 = scmp.eq.s32.totalorder %s31, 1
      %p157 = scmp.ne.s32.totalorder %s152, %s154
      %p158 = scmp.eq.s32.totalorder %s31, 0
      %p159 = por %p157, %p158
      %p160 = scmp.ne.s32.totalorder %s152, %s154
      %p161 = scmp.eq.s32.totalorder %s36, 1
      %p162 = por %p160, %p161
      %p163 = scmp.ne.s32.totalorder %s154, %s155
      %p164 = scmp.eq.s32.totalorder %s36, 0
      %p165 = por %p163, %p164
      %p166 = scmp.ne.s32.totalorder %s154, %s155
      %p167 = scmp.eq.s32.totalorder %s37, 1
      %p168 = por %p166, %p167
      %p170 = scmp.ne.s32.totalorder %s155, %s169
      %p171 = scmp.eq.s32.totalorder %s37, 0
      %p172 = por %p170, %p171
      %s174 = sadd.s32 %s173, 1
      %p177 = scmp.eq.s32.totalorder %s31, 1
      %p178 = scmp.ne.s32.totalorder %s173, %s175
      %p179 = scmp.eq.s32.totalorder %s31, 0
      %p180 = por %p178, %p179
      %p181 = scmp.ne.s32.totalorder %s173, %s175
      %p182 = scmp.eq.s32.totalorder %s36, 1
      %p183 = por %p181, %p182
      %p184 = scmp.ne.s32.totalorder %s175, %s176
      %p185 = scmp.eq.s32.totalorder %s36, 0
      %p186 = por %p184, %p185
      %p187 = scmp.ne.s32.totalorder %s175, %s176
      %p188 = scmp.eq.s32.totalorder %s37, 1
      %p189 = por %p187, %p188
      %p191 = scmp.ne.s32.totalorder %s176, %s190
      %p192 = scmp.eq.s32.totalorder %s37, 0
      %p193 = por %p191, %p192
      %s195 = sadd.s32 %s194, 1
      %p198 = scmp.eq.s32.totalorder %s31, 1
      %p199 = scmp.ne.s32.totalorder %s194, %s196
      %p200 = scmp.eq.s32.totalorder %s31, 0
      %p201 = por %p199, %p200
      %p202 = scmp.ne.s32.totalorder %s194, %s196
      %p203 = scmp.eq.s32.totalorder %s36, 1
      %p204 = por %p202, %p203
      %p205 = scmp.ne.s32.totalorder %s196, %s197
      %p206 = scmp.eq.s32.totalorder %s36, 0
      %p207 = por %p205, %p206
      %p208 = scmp.ne.s32.totalorder %s196, %s197
      %p209 = scmp.eq.s32.totalorder %s37, 1
      %p210 = por %p208, %p209
      %p212 = scmp.ne.s32.totalorder %s197, %s211
      %p213 = scmp.eq.s32.totalorder %s37, 0
      %p214 = por %p212, %p213
      %s216 = sadd.s32 %s215, 1
      %p219 = scmp.eq.s32.totalorder %s31, 1
      %p220 = scmp.ne.s32.totalorder %s215, %s217
      %p221 = scmp.eq.s32.totalorder %s31, 0
      %p222 = por %p220, %p221
      %p223 = scmp.ne.s32.totalorder %s215, %s217
      %p224 = scmp.eq.s32.totalorder %s36, 1
      %p225 = por %p223, %p224
      %p226 = scmp.ne.s32.totalorder %s217, %s218
      %p227 = scmp.eq.s32.totalorder %s36, 0
      %p228 = por %p226, %p227
      %p229 = scmp.ne.s32.totalorder %s217, %s218
      %p230 = scmp.eq.s32.totalorder %s37, 1
      %p231 = por %p229, %p230
      %p233 = scmp.ne.s32.totalorder %s218, %s232
      %p234 = scmp.eq.s32.totalorder %s37, 0
      %p235 = por %p233, %p234
      %s236 = ssub.s32 %s38, %s50
      %s237 = ssub.s32 %s39, %s46
      %s238 = sor.u32 %s236, %s237
      %p239 = scmp.eq.s32.totalorder %s238, 0
      %s241 = sadd.s32 %s240, 1
      %s242 = scalar_select %p239, %s240, %s241
      %p245 = pneg %p239
      %p246 = scmp.eq.s32.totalorder %s31, 1
      %p247 = por %p245, %p246
      %p248 = scmp.ne.s32.totalorder %s240, %s243
      %p249 = scmp.eq.s32.totalorder %s31, 0
      %p250 = por %p248, %p249
      %p251 = scmp.ne.s32.totalorder %s240, %s243
      %p252 = scmp.eq.s32.totalorder %s36, 1
      %p253 = por %p251, %p252
      %p254 = scmp.ne.s32.totalorder %s243, %s244
      %p255 = scmp.eq.s32.totalorder %s36, 0
      %p256 = por %p254, %p255
      %p257 = scmp.ne.s32.totalorder %s243, %s244
      %p258 = scmp.eq.s32.totalorder %s37, 1
      %p259 = por %p257, %p258
      %p261 = scmp.ne.s32.totalorder %s244, %s260
      %p262 = scmp.eq.s32.totalorder %s37, 0
      %p263 = por %p261, %p262
      %s264 = ssub.s32 %s38, %s50
      %s265 = ssub.s32 %s39, %s46
      %s266 = sor.u32 %s264, %s265
      %p267 = scmp.eq.s32.totalorder %s266, 0
      %s269 = sadd.s32 %s268, 1
      %s270 = scalar_select %p267, %s268, %s269
      %p273 = pneg %p267
      %p274 = scmp.eq.s32.totalorder %s31, 1
      %p275 = por %p273, %p274
      %p276 = scmp.ne.s32.totalorder %s268, %s271
      %p277 = scmp.eq.s32.totalorder %s31, 0
      %p278 = por %p276, %p277
      %p279 = scmp.ne.s32.totalorder %s268, %s271
      %p280 = scmp.eq.s32.totalorder %s36, 1
      %p281 = por %p279, %p280
      %p282 = scmp.ne.s32.totalorder %s271, %s272
      %p283 = scmp.eq.s32.totalorder %s36, 0
      %p284 = por %p282, %p283
      %p285 = scmp.ne.s32.totalorder %s271, %s272
      %p286 = scmp.eq.s32.totalorder %s37, 1
      %p287 = por %p285, %p286
      %p289 = scmp.ne.s32.totalorder %s272, %s288
      %p290 = scmp.eq.s32.totalorder %s37, 0
      %p291 = por %p289, %p290
      %p292 = scmp.le.s32.totalorder 1, %s31
      %p293 = scmp.lt.s32.totalorder %s31, 3
      %p294 = pnand %p292, %p293
      %p295 = pneg %p294
      // Predicated region
      $region9: #{tpu_custom_call.1} parent=5 // pred_check
        _
      $region10: #{tpu_custom_call.1} parent=5 // pred_check_branch
        %297 = sbr.rel (%p294) target = $region12
      $region11: #{tpu_custom_call.1} parent=5 // pred_region
        %s298 = ssub.s32 %s31, 1
        // Predicated region
        $region13: #{tpu_custom_call.1} parent=11 // pred_check
          %p299 = pneg %p144
        $region14: #{tpu_custom_call.1} parent=11 // pred_check_branch
          %301 = sbr.rel (%p299) target = $region16
        $region15: #{tpu_custom_call.1} parent=11 // pred_region
          %s303 = ssub.s32 512, 512
          %304 = vsyncadd [#allocation11], %s303
          %s305 = sshll.u32 [#allocation10], 4
          %s306 = int_to_ptr.vmem [resolvable:$true] %s305
          %311 = dma.hbm_to_vmem [thread:$0]  %s3, 512, %s306, [#allocation11], 64, 64, 4
        $region16: #{tpu_custom_call.1} parent=11 // pred_fallthru
          _
        // Predicated region
        $region17: #{tpu_custom_call.1} parent=11 // pred_check
          %p312 = pneg %p165
        $region18: #{tpu_custom_call.1} parent=11 // pred_check_branch
          %314 = sbr.rel (%p312) target = $region20
        $region19: #{tpu_custom_call.1} parent=11 // pred_region
          %s316 = ssub.s32 512, 512
          %317 = vsyncadd [#allocation11], %s316
          %s318 = sshll.u32 [#allocation12], 4
          %s319 = int_to_ptr.vmem [resolvable:$true] %s318
          %324 = dma.hbm_to_vmem [thread:$0]  %s4, 512, %s319, [#allocation11], 64, 64, 4
        $region20: #{tpu_custom_call.1} parent=11 // pred_fallthru
          _
        // Predicated region
        $region21: #{tpu_custom_call.1} parent=11 // pred_check
          %p325 = pneg %p186
        $region22: #{tpu_custom_call.1} parent=11 // pred_check_branch
          %327 = sbr.rel (%p325) target = $region24
        $region23: #{tpu_custom_call.1} parent=11 // pred_region
          %s329 = ssub.s32 512, 512
          %330 = vsyncadd [#allocation14], %s329
          %s331 = sshll.u32 [#allocation13], 4
          %s332 = int_to_ptr.vmem [resolvable:$true] %s331
          %337 = dma.hbm_to_vmem [thread:$0]  %s5, 512, %s332, [#allocation14], 64, 64, 4
        $region24: #{tpu_custom_call.1} parent=11 // pred_fallthru
          _
        // Predicated region
        $region25: #{tpu_custom_call.1} parent=11 // pred_check
          %p338 = pneg %p207
        $region26: #{tpu_custom_call.1} parent=11 // pred_check_branch
          %340 = sbr.rel (%p338) target = $region28
        $region27: #{tpu_custom_call.1} parent=11 // pred_region
          %s342 = ssub.s32 512, 512
          %343 = vsyncadd [#allocation14], %s342
          %s344 = sshll.u32 [#allocation15], 4
          %s345 = int_to_ptr.vmem [resolvable:$true] %s344
          %350 = dma.hbm_to_vmem [thread:$0]  %s6, 512, %s345, [#allocation14], 64, 64, 4
        $region28: #{tpu_custom_call.1} parent=11 // pred_fallthru
          _
        // Predicated region
        $region29: #{tpu_custom_call.1} parent=11 // pred_check
          %p351 = pneg %p228
        $region30: #{tpu_custom_call.1} parent=11 // pred_check_branch
          %353 = sbr.rel (%p351) target = $region32
        $region31: #{tpu_custom_call.1} parent=11 // pred_region
          %s355 = ssub.s32 16, 16
          %356 = vsyncadd [#allocation17], %s355
          %s358 = sshll.u32 [#allocation16], 4
          %s359 = int_to_ptr.vmem [resolvable:$true] %s358
          %361 = dma.hbm_to_vmem [thread:$0]  %s7, 16, %s359, [#allocation17]
        $region32: #{tpu_custom_call.1} parent=11 // pred_fallthru
          _
      $region12: #{tpu_custom_call.1} parent=5 // pred_fallthru
        _
      %p362 = scmp.lt.s32.totalorder %s31, 2
      // Predicated region
      $region33: #{tpu_custom_call.1} parent=5 // pred_check
        %p363 = pneg %p362
      $region34: #{tpu_custom_call.1} parent=5 // pred_check_branch
        %365 = sbr.rel (%p363) target = $region36
      $region35: #{tpu_custom_call.1} parent=5 // pred_region
        // Predicated region
        $region37: #{tpu_custom_call.1} parent=35 // pred_check
          %p366 = pneg %p65
        $region38: #{tpu_custom_call.1} parent=35 // pred_check_branch
          %368 = sbr.rel (%p366) target = $region40
        $region39: #{tpu_custom_call.1} parent=35 // pred_region
          %s369 = sand.u32 %s55, 1
          %s370 = scalar_lea.sflag [#allocation5], %s369
          %s371 = sand.u32 %s55, 1
          %s372 = smul.addr %s371, 4
          %s373 = scalar_lea.vmem [#allocation4], %s372
          %s375 = ssub.s32 64, 64
          %376 = vsyncadd %s370, %s375
          %s377 = sadd.s32 %s39, %s38
          %s378 = smul.addr %s377, 64
          %s379 = scalar_lea.hbm %s0, %s378
          %s381 = sshll.u32 %s373, 4
          %s382 = int_to_ptr.vmem [resolvable:$true] %s381
          %384 = dma.hbm_to_vmem [thread:$0]  %s379, 64, %s382, %s370
        $region40: #{tpu_custom_call.1} parent=35 // pred_fallthru
          _
        // Predicated region
        $region41: #{tpu_custom_call.1} parent=35 // pred_check
          %p385 = pneg %p91
        $region42: #{tpu_custom_call.1} parent=35 // pred_check_branch
          %387 = sbr.rel (%p385) target = $region44
        $region43: #{tpu_custom_call.1} parent=35 // pred_region
          %s388 = sand.u32 %s31, 1
          %s389 = scalar_lea.sflag [#allocation8], %s388
          %s390 = sand.u32 %s81, 1
          %s391 = smul.addr %s390, 4
          %s392 = scalar_lea.vmem [#allocation7], %s391
          %s394 = ssub.s32 64, 64
          %395 = vsyncadd %s389, %s394
          %s396 = smul.addr %s38, 64
          %s397 = scalar_lea.hbm %s1, %s396
          %s399 = sshll.u32 %s392, 4
          %s400 = int_to_ptr.vmem [resolvable:$true] %s399
          %402 = dma.hbm_to_vmem [thread:$0]  %s397, 64, %s400, %s389
        $region44: #{tpu_custom_call.1} parent=35 // pred_fallthru
          _
        // Predicated region
        $region45: #{tpu_custom_call.1} parent=35 // pred_check
          %p403 = pneg %p117
        $region46: #{tpu_custom_call.1} parent=35 // pred_check_branch
          %405 = sbr.rel (%p403) target = $region48
        $region47: #{tpu_custom_call.1} parent=35 // pred_region
          %s406 = sand.u32 %s31, 1
          %s407 = scalar_lea.sflag [#allocation8], %s406
          %s408 = sand.u32 %s107, 1
          %s409 = smul.addr %s408, 4
          %s410 = scalar_lea.vmem [#allocation9], %s409
          %s412 = ssub.s32 64, 64
          %413 = vsyncadd %s407, %s412
          %s414 = smul.addr %s38, 64
          %s415 = scalar_lea.hbm %s2, %s414
          %s417 = sshll.u32 %s410, 4
          %s418 = int_to_ptr.vmem [resolvable:$true] %s417
          %420 = dma.hbm_to_vmem [thread:$0]  %s415, 64, %s418, %s407
        $region48: #{tpu_custom_call.1} parent=35 // pred_fallthru
          _
      $region36: #{tpu_custom_call.1} parent=5 // pred_fallthru
        _
      %p421 = scmp.le.s32.totalorder 1, %s31
      %p422 = scmp.lt.s32.totalorder %s31, 3
      %p423 = pnand %p421, %p422
      %p424 = pneg %p423
      // Predicated region
      $region49: #{tpu_custom_call.1} parent=5 // pred_check
        _
      $region50: #{tpu_custom_call.1} parent=5 // pred_check_branch
        %426 = sbr.rel (%p423) target = $region52
      $region51: #{tpu_custom_call.1} parent=5 // pred_region
        %s427 = ssub.s32 %s31, 1
        %s428 = sand.u32 %s58, 1
        %s429 = scalar_lea.sflag [#allocation5], %s428
        %s430 = sand.u32 %s58, 1
        %s431 = smul.addr %s430, 4
        %s432 = scalar_lea.vmem [#allocation4], %s431
        // Predicated region
        $region53: #{tpu_custom_call.1} parent=51 // pred_check
          %p433 = pneg %p71
        $region54: #{tpu_custom_call.1} parent=51 // pred_check_branch
          %435 = sbr.rel (%p433) target = $region56
        $region55: #{tpu_custom_call.1} parent=51 // pred_region
          %436 = dma.done %s429, 64
        $region56: #{tpu_custom_call.1} parent=51 // pred_fallthru
          _
        %s437 = sand.u32 %s36, 1
        %s438 = scalar_lea.sflag [#allocation8], %s437
        %s439 = sand.u32 %s84, 1
        %s440 = smul.addr %s439, 4
        %s441 = scalar_lea.vmem [#allocation7], %s440
        // Predicated region
        $region57: #{tpu_custom_call.1} parent=51 // pred_check
          %p442 = pneg %p97
        $region58: #{tpu_custom_call.1} parent=51 // pred_check_branch
          %444 = sbr.rel (%p442) target = $region60
        $region59: #{tpu_custom_call.1} parent=51 // pred_region
          %445 = dma.done %s438, 64
        $region60: #{tpu_custom_call.1} parent=51 // pred_fallthru
          _
        %s446 = sand.u32 %s36, 1
        %s447 = scalar_lea.sflag [#allocation8], %s446
        %s448 = sand.u32 %s110, 1
        %s449 = smul.addr %s448, 4
        %s450 = scalar_lea.vmem [#allocation9], %s449
        // Predicated region
        $region61: #{tpu_custom_call.1} parent=51 // pred_check
          %p451 = pneg %p123
        $region62: #{tpu_custom_call.1} parent=51 // pred_check_branch
          %453 = sbr.rel (%p451) target = $region64
        $region63: #{tpu_custom_call.1} parent=51 // pred_region
          %454 = dma.done %s447, 64
        $region64: #{tpu_custom_call.1} parent=51 // pred_fallthru
          _
        // Predicated region
        $region65: #{tpu_custom_call.1} parent=51 // pred_check
          %p455 = pneg %p144
        $region66: #{tpu_custom_call.1} parent=51 // pred_check_branch
          %457 = sbr.rel (%p455) target = $region68
        $region67: #{tpu_custom_call.1} parent=51 // pred_region
          %458 = dma.done [#allocation11], 512
        $region68: #{tpu_custom_call.1} parent=51 // pred_fallthru
          _
        // Predicated region
        $region69: #{tpu_custom_call.1} parent=51 // pred_check
          %p459 = pneg %p165
        $region70: #{tpu_custom_call.1} parent=51 // pred_check_branch
          %461 = sbr.rel (%p459) target = $region72
        $region71: #{tpu_custom_call.1} parent=51 // pred_region
          %462 = dma.done [#allocation11], 512
        $region72: #{tpu_custom_call.1} parent=51 // pred_fallthru
          _
        // Predicated region
        $region73: #{tpu_custom_call.1} parent=51 // pred_check
          %p463 = pneg %p186
        $region74: #{tpu_custom_call.1} parent=51 // pred_check_branch
          %465 = sbr.rel (%p463) target = $region76
        $region75: #{tpu_custom_call.1} parent=51 // pred_region
          %466 = dma.done [#allocation14], 512
        $region76: #{tpu_custom_call.1} parent=51 // pred_fallthru
          _
        // Predicated region
        $region77: #{tpu_custom_call.1} parent=51 // pred_check
          %p467 = pneg %p207
        $region78: #{tpu_custom_call.1} parent=51 // pred_check_branch
          %469 = sbr.rel (%p467) target = $region80
        $region79: #{tpu_custom_call.1} parent=51 // pred_region
          %470 = dma.done [#allocation14], 512
        $region80: #{tpu_custom_call.1} parent=51 // pred_fallthru
          _
        // Predicated region
        $region81: #{tpu_custom_call.1} parent=51 // pred_check
          %p471 = pneg %p228
        $region82: #{tpu_custom_call.1} parent=51 // pred_check_branch
          %473 = sbr.rel (%p471) target = $region84
        $region83: #{tpu_custom_call.1} parent=51 // pred_region
          %474 = dma.done [#allocation17], 16
        $region84: #{tpu_custom_call.1} parent=51 // pred_fallthru
          _
        %s475 = sand.u32 %s58, 1
        %s476 = scalar_lea.sflag [#allocation5], %s475
        %s477 = sand.u32 %s58, 1
        %s478 = smul.addr %s477, 4
        %s479 = scalar_lea.vmem [#allocation4], %s478
        %p480 = pneg %p71
        %p481 = pneg %p68
        %s482 = sand.u32 %s36, 1
        %s483 = scalar_lea.sflag [#allocation8], %s482
        %s484 = sand.u32 %s84, 1
        %s485 = smul.addr %s484, 4
        %s486 = scalar_lea.vmem [#allocation7], %s485
        %p487 = pneg %p97
        %p488 = pneg %p94
        %s489 = sand.u32 %s36, 1
        %s490 = scalar_lea.sflag [#allocation8], %s489
        %s491 = sand.u32 %s110, 1
        %s492 = smul.addr %s491, 4
        %s493 = scalar_lea.vmem [#allocation9], %s492
        %p494 = pneg %p123
        %p495 = pneg %p120
        %p496 = pneg %p144
        %p497 = pneg %p141
        %p498 = pneg %p165
        %p499 = pneg %p162
        %p500 = pneg %p186
        %p501 = pneg %p183
        %p502 = pneg %p207
        %p503 = pneg %p204
        %p504 = pneg %p228
        %p505 = pneg %p225
        %p506 = pneg %p256
        %p507 = pneg %p253
        %s508 = sand.u32 %s243, 1
        %s509 = scalar_lea.sflag [#allocation6], %s508
        %s510 = sand.u32 %s243, 1
        %s511 = smul.addr %s510, 8
        %s512 = scalar_lea.vmem [#allocation18], %s511
        %p513 = pneg %p284
        %p514 = pneg %p281
        %s515 = sand.u32 %s271, 1
        %s516 = scalar_lea.sflag [#allocation20], %s515
        %s517 = sand.u32 %s271, 1
        %s518 = smul.addr %s517, 64
        %s519 = scalar_lea.vmem [#allocation19], %s518
        %p521 = scmp.eq.s32.totalorder %s41, 0
        // Predicated region
        $region85: #{tpu_custom_call.1} parent=51 // pred_check
          %p522 = pneg %p521
        $region86: #{tpu_custom_call.1} parent=51 // pred_check_branch
          %524 = sbr.rel (%p522) target = $region88
        $region87: #{tpu_custom_call.1} parent=51 // pred_region
          %v525 = vld [vmem:[%s441] sm:$0xf]
          %v526 = vld [vmem:[#allocation12] sm:$0xf]
          %v527 = vld [vmem:[#allocation12 + $0x4] sm:$0xf]
          %v528 = vld [vmem:[#allocation12 + $0x8] sm:$0xf]
          %v529 = vld [vmem:[#allocation12 + $0xc] sm:$0xf]
          %v530 = vld [vmem:[#allocation12 + $0x10] sm:$0xf]
          %v531 = vld [vmem:[#allocation12 + $0x14] sm:$0xf]
          %v532 = vld [vmem:[#allocation12 + $0x18] sm:$0xf]
          %v533 = vld [vmem:[#allocation12 + $0x1c] sm:$0xf]
          %v542 = vunpack.c.l.b16 %v526
          %v543 = vunpack.c.l.b16 %v527
          %v544 = vunpack.c.l.b16 %v528
          %v545 = vunpack.c.l.b16 %v529
          %v546 = vunpack.c.l.b16 %v530
          %v547 = vunpack.c.l.b16 %v531
          %v548 = vunpack.c.l.b16 %v532
          %v549 = vunpack.c.l.b16 %v533
          %v550 = vpack.c.b16 %v543, %v542
          %v551 = vpack.c.b16 %v545, %v544
          %v552 = vpack.c.b16 %v547, %v546
          %v553 = vpack.c.b16 %v549, %v548
          %vm558 = vcmask 523264
          %v560 = vsel %vm558, %v525, 0
          %562 = vmatprep.subr.bf16.mxu0 0
          %563 = vmatpush1.bf16.msra.mxu0 %v550
          %564 = vmatprep.subr.bf16.mxu0 0
          %565 = vmatpush1.bf16.msra.mxu0 %v551
          %566 = vmatprep.subr.bf16.mxu0 0
          %567 = vmatpush1.bf16.msra.mxu0 %v552
          %568 = vmatprep.subr.bf16.mxu0 0
          %569 = vmatpush1.bf16.msra.mxu0 %v553
          %570 = vmatprep.subr.bf16.mxu0 0
          %571 = vmatpush1.bf16.msra.mxu0 0
          %572 = vmatprep.subr.bf16.mxu0 0
          %573 = vmatpush1.bf16.msra.mxu0 0
          %574 = vmatprep.subr.bf16.mxu0 0
          %575 = vmatpush1.bf16.msra.mxu0 0
          %576 = vmatprep.subr.bf16.mxu0 0
          %577 = vmatpush1.bf16.msra.mxu0 0
          %578 = vmatprep.subr.bf16.mxu0 0
          %579 = vmatpush1.bf16.msra.mxu0 0
          %580 = vmatprep.subr.bf16.mxu0 0
          %581 = vmatpush1.bf16.msra.mxu0 0
          %582 = vmatprep.subr.bf16.mxu0 0
          %583 = vmatpush1.bf16.msra.mxu0 0
          %584 = vmatprep.subr.bf16.mxu0 0
          %585 = vmatpush1.bf16.msra.mxu0 0
          %586 = vmatprep.subr.bf16.mxu0 0
          %587 = vmatpush1.bf16.msra.mxu0 0
          %588 = vmatprep.subr.bf16.mxu0 0
          %589 = vmatpush1.bf16.msra.mxu0 0
          %590 = vmatprep.subr.bf16.mxu0 0
          %591 = vmatpush1.bf16.msra.mxu0 0
          %592 = vmatprep.subr.bf16.mxu0 0
          %593 = vmatpush1.bf16.msra.mxu0 0
          %594 = vmatprep.mubr.bf16.mxu0 0
          %595 = vmatmul.mubr.bf16.gmra.mrb[0].mxu0 %v560
          %v596 = vpop.f32.mrb[0].mxu0
          %v597 = vadd.f32 0.0, %v596
          %v598 = vpop.f32.mrb[0].mxu0
          %v599 = vpop.f32.mrb[0].mxu0
          %v600 = vpop.f32.mrb[0].mxu0
          %601 = vdwg.mxu0
          %602 = vst.msk [vmem:[#allocation2] sm:$0xff] %vm558, %v597
          %v603 = vld [vmem:[%s450] sm:$0xf]
          %v604 = vld [vmem:[#allocation13] sm:$0xf]
          %v605 = vld [vmem:[#allocation13 + $0x4] sm:$0xf]
          %v606 = vld [vmem:[#allocation13 + $0x8] sm:$0xf]
          %v607 = vld [vmem:[#allocation13 + $0xc] sm:$0xf]
          %v608 = vld [vmem:[#allocation13 + $0x10] sm:$0xf]
          %v609 = vld [vmem:[#allocation13 + $0x14] sm:$0xf]
          %v610 = vld [vmem:[#allocation13 + $0x18] sm:$0xf]
          %v611 = vld [vmem:[#allocation13 + $0x1c] sm:$0xf]
          %v620 = vunpack.c.l.b16 %v604
          %v621 = vunpack.c.l.b16 %v605
          %v622 = vunpack.c.l.b16 %v606
          %v623 = vunpack.c.l.b16 %v607
          %v624 = vunpack.c.l.b16 %v608
          %v625 = vunpack.c.l.b16 %v609
          %v626 = vunpack.c.l.b16 %v610
          %v627 = vunpack.c.l.b16 %v611
          %v628 = vpack.c.b16 %v621, %v620
          %v629 = vpack.c.b16 %v623, %v622
          %v630 = vpack.c.b16 %v625, %v624
          %v631 = vpack.c.b16 %v627, %v626
          %v637 = vsel %vm558, %v603, 0
          %639 = vmatprep.subr.bf16.mxu0 0
          %640 = vmatpush1.bf16.msra.mxu0 %v628
          %641 = vmatprep.subr.bf16.mxu0 0
          %642 = vmatpush1.bf16.msra.mxu0 %v629
          %643 = vmatprep.subr.bf16.mxu0 0
          %644 = vmatpush1.bf16.msra.mxu0 %v630
          %645 = vmatprep.subr.bf16.mxu0 0
          %646 = vmatpush1.bf16.msra.mxu0 %v631
          %647 = vmatprep.subr.bf16.mxu0 0
          %648 = vmatpush1.bf16.msra.mxu0 0
          %649 = vmatprep.subr.bf16.mxu0 0
          %650 = vmatpush1.bf16.msra.mxu0 0
          %651 = vmatprep.subr.bf16.mxu0 0
          %652 = vmatpush1.bf16.msra.mxu0 0
          %653 = vmatprep.subr.bf16.mxu0 0
          %654 = vmatpush1.bf16.msra.mxu0 0
          %655 = vmatprep.subr.bf16.mxu0 0
          %656 = vmatpush1.bf16.msra.mxu0 0
          %657 = vmatprep.subr.bf16.mxu0 0
          %658 = vmatpush1.bf16.msra.mxu0 0
          %659 = vmatprep.subr.bf16.mxu0 0
          %660 = vmatpush1.bf16.msra.mxu0 0
          %661 = vmatprep.subr.bf16.mxu0 0
          %662 = vmatpush1.bf16.msra.mxu0 0
          %663 = vmatprep.subr.bf16.mxu0 0
          %664 = vmatpush1.bf16.msra.mxu0 0
          %665 = vmatprep.subr.bf16.mxu0 0
          %666 = vmatpush1.bf16.msra.mxu0 0
          %667 = vmatprep.subr.bf16.mxu0 0
          %668 = vmatpush1.bf16.msra.mxu0 0
          %669 = vmatprep.subr.bf16.mxu0 0
          %670 = vmatpush1.bf16.msra.mxu0 0
          %671 = vmatprep.mubr.bf16.mxu0 0
          %672 = vmatmul.mubr.bf16.gmra.mrb[0].mxu0 %v637
          %v673 = vpop.f32.mrb[0].mxu0
          %v674 = vadd.f32 0.0, %v673
          %v675 = vpop.f32.mrb[0].mxu0
          %v676 = vpop.f32.mrb[0].mxu0
          %v677 = vpop.f32.mrb[0].mxu0
          %678 = vdwg.mxu0
          %v679 = vpack.c.bf16 %v674, %v674
          %vm680 = vcmask 519168
          %681 = vst.msk [vmem:[#allocation3] sm:$0xf] %vm680, %v679
        $region88: #{tpu_custom_call.1} parent=51 // pred_fallthru
          _
        %v682 = vld [vmem:[%s432] sm:$0xf]
        %v683 = vld [vmem:[#allocation10] sm:$0xf]
        %v684 = vld [vmem:[#allocation10 + $0x4] sm:$0xf]
        %v685 = vld [vmem:[#allocation10 + $0x8] sm:$0xf]
        %v686 = vld [vmem:[#allocation10 + $0xc] sm:$0xf]
        %v687 = vld [vmem:[#allocation10 + $0x10] sm:$0xf]
        %v688 = vld [vmem:[#allocation10 + $0x14] sm:$0xf]
        %v689 = vld [vmem:[#allocation10 + $0x18] sm:$0xf]
        %v690 = vld [vmem:[#allocation10 + $0x1c] sm:$0xf]
        %v699 = vunpack.c.l.b16 %v683
        %v700 = vunpack.c.l.b16 %v684
        %v701 = vunpack.c.l.b16 %v685
        %v702 = vunpack.c.l.b16 %v686
        %v703 = vunpack.c.l.b16 %v687
        %v704 = vunpack.c.l.b16 %v688
        %v705 = vunpack.c.l.b16 %v689
        %v706 = vunpack.c.l.b16 %v690
        %v707 = vpack.c.b16 %v700, %v699
        %v708 = vpack.c.b16 %v702, %v701
        %v709 = vpack.c.b16 %v704, %v703
        %v710 = vpack.c.b16 %v706, %v705
        %vm715 = vcmask 523264
        %v717 = vsel %vm715, %v682, 0
        %719 = vmatprep.subr.bf16.mxu0 0
        %720 = vmatpush1.bf16.msra.mxu0 %v707
        %721 = vmatprep.subr.bf16.mxu0 0
        %722 = vmatpush1.bf16.msra.mxu0 %v708
        %723 = vmatprep.subr.bf16.mxu0 0
        %724 = vmatpush1.bf16.msra.mxu0 %v709
        %725 = vmatprep.subr.bf16.mxu0 0
        %726 = vmatpush1.bf16.msra.mxu0 %v710
        %727 = vmatprep.subr.bf16.mxu0 0
        %728 = vmatpush1.bf16.msra.mxu0 0
        %729 = vmatprep.subr.bf16.mxu0 0
        %730 = vmatpush1.bf16.msra.mxu0 0
        %731 = vmatprep.subr.bf16.mxu0 0
        %732 = vmatpush1.bf16.msra.mxu0 0
        %733 = vmatprep.subr.bf16.mxu0 0
        %734 = vmatpush1.bf16.msra.mxu0 0
        %735 = vmatprep.subr.bf16.mxu0 0
        %736 = vmatpush1.bf16.msra.mxu0 0
        %737 = vmatprep.subr.bf16.mxu0 0
        %738 = vmatpush1.bf16.msra.mxu0 0
        %739 = vmatprep.subr.bf16.mxu0 0
        %740 = vmatpush1.bf16.msra.mxu0 0
        %741 = vmatprep.subr.bf16.mxu0 0
        %742 = vmatpush1.bf16.msra.mxu0 0
        %743 = vmatprep.subr.bf16.mxu0 0
        %744 = vmatpush1.bf16.msra.mxu0 0
        %745 = vmatprep.subr.bf16.mxu0 0
        %746 = vmatpush1.bf16.msra.mxu0 0
        %747 = vmatprep.subr.bf16.mxu0 0
        %748 = vmatpush1.bf16.msra.mxu0 0
        %749 = vmatprep.subr.bf16.mxu0 0
        %750 = vmatpush1.bf16.msra.mxu0 0
        %751 = vmatprep.mubr.bf16.mxu0 0
        %752 = vmatmul.mubr.bf16.gmra.mrb[0].mxu0 %v717
        %v753 = vpop.f32.mrb[0].mxu0
        %v754 = vadd.f32 0.0, %v753
        %v755 = vpop.f32.mrb[0].mxu0
        %v756 = vpop.f32.mrb[0].mxu0
        %v757 = vpop.f32.mrb[0].mxu0
        %758 = vdwg.mxu0
        %v759 = vld [vmem:[#allocation2] sm:$0xff]
        %v760 = vld [vmem:[#allocation3] sm:$0xf]
        %vm761 = vcmask 64512
        %v763 = vsel %vm761, %v754, 0
        %v766 = vsel %vm761, %v759, 0
        %768 = vmatprep.subr.mxu0 0.0
        %769 = vmatpush1.xpose.msra.mxu0 %v766
        %770 = vmatprep.subr.mxu0 0.0
        %771 = vmatpush1.xpose.msra.mxu0 0.0
        %772 = vmatprep.subr.mxu0 0.0
        %773 = vmatpush1.xpose.msra.mxu0 0.0
        %774 = vmatprep.subr.mxu0 0.0
        %775 = vmatpush1.xpose.msra.mxu0 0.0
        %776 = vmatprep.subr.mxu0 0.0
        %777 = vmatpush1.xpose.msra.mxu0 0.0
        %778 = vmatprep.subr.mxu0 0.0
        %779 = vmatpush1.xpose.msra.mxu0 0.0
        %780 = vmatprep.subr.mxu0 0.0
        %781 = vmatpush1.xpose.msra.mxu0 0.0
        %782 = vmatprep.subr.mxu0 0.0
        %783 = vmatpush1.xpose.msra.mxu0 0.0
        %784 = vmatprep.subr.mxu0 0.0
        %785 = vmatpush1.xpose.msra.mxu0 0.0
        %786 = vmatprep.subr.mxu0 0.0
        %787 = vmatpush1.xpose.msra.mxu0 0.0
        %788 = vmatprep.subr.mxu0 0.0
        %789 = vmatpush1.xpose.msra.mxu0 0.0
        %790 = vmatprep.subr.mxu0 0.0
        %791 = vmatpush1.xpose.msra.mxu0 0.0
        %792 = vmatprep.subr.mxu0 0.0
        %793 = vmatpush1.xpose.msra.mxu0 0.0
        %794 = vmatprep.subr.mxu0 0.0
        %795 = vmatpush1.xpose.msra.mxu0 0.0
        %796 = vmatprep.subr.mxu0 0.0
        %797 = vmatpush1.xpose.msra.mxu0 0.0
        %798 = vmatprep.subr.mxu0 0.0
        %799 = vmatpush1.xpose.msra.mxu0 0.0
        %800 = vmatprep.subr.mxu0 0.0
        %801 = vmatpush1.xpose.msra.mxu0 0.0
        %802 = vmatprep.subr.mxu0 0.0
        %803 = vmatpush1.xpose.msra.mxu0 0.0
        %804 = vmatprep.subr.mxu0 0.0
        %805 = vmatpush1.xpose.msra.mxu0 0.0
        %806 = vmatprep.subr.mxu0 0.0
        %807 = vmatpush1.xpose.msra.mxu0 0.0
        %808 = vmatprep.subr.mxu0 0.0
        %809 = vmatpush1.xpose.msra.mxu0 0.0
        %810 = vmatprep.subr.mxu0 0.0
        %811 = vmatpush1.xpose.msra.mxu0 0.0
        %812 = vmatprep.subr.mxu0 0.0
        %813 = vmatpush1.xpose.msra.mxu0 0.0
        %814 = vmatprep.subr.mxu0 0.0
        %815 = vmatpush1.xpose.msra.mxu0 0.0
        %816 = vmatprep.subr.mxu0 0.0
        %817 = vmatpush1.xpose.msra.mxu0 0.0
        %818 = vmatprep.subr.mxu0 0.0
        %819 = vmatpush1.xpose.msra.mxu0 0.0
        %820 = vmatprep.subr.mxu0 0.0
        %821 = vmatpush1.xpose.msra.mxu0 0.0
        %822 = vmatprep.subr.mxu0 0.0
        %823 = vmatpush1.xpose.msra.mxu0 0.0
        %824 = vmatprep.subr.mxu0 0.0
        %825 = vmatpush1.xpose.msra.mxu0 0.0
        %826 = vmatprep.subr.mxu0 0.0
        %827 = vmatpush1.xpose.msra.mxu0 0.0
        %828 = vmatprep.subr.mxu0 0.0
        %829 = vmatpush1.xpose.msra.mxu0 0.0
        %830 = vmatprep.subr.mxu0 0.0
        %831 = vmatpush1.xpose.msra.mxu0 0.0
        %832 = vmatprep.mubr.f32.mxu0 0.0
        %833 = vmatmul.mubr.f32.gmra.mrb[0].mxu0 %v763
        %v834 = vpop.f32.mrb[0].mxu0
        %v835 = vadd.f32 0.0, %v834
        %v836 = vpop.f32.mrb[0].mxu0
        %837 = vdwg.mxu0
        %v838 = vmul.f32 %v835, 0.35355338
        %v839 = vsel %vm761, %v838, -inf
        %840 = vmax.xlane.f32.xlu0 %v839
        %v841 = vpop.xlane.xlu0 %840
        %v842 = vsub.f32 %v838, %v841
        %v843 = vmul.f32 %v842, 1.442695
        %v844 = vpow.pop %v843
        %v845 = vsel %vm761, %v844, 0.0
        %846 = vadd.xlane.f32.xlu0 %v845
        %v847 = vpop.xlane.xlu0 %846
        %v848 = vrcp.pop %v847
        %v849 = vmul.f32 %v844, %v848
        %v850 = vpack.c.bf16 %v849, %v849
        %v852 = vsel %vm761, %v850, 0
        %vm854 = vcmask 1043456
        %v856 = vsel %vm854, %v760, 0
        %858 = vmatprep.subr.bf16.mxu0 0
        %859 = vmatpush1.bf16.msra.mxu0 %v856
        %860 = vmatprep.subr.bf16.mxu0 0
        %861 = vmatpush1.bf16.msra.mxu0 0
        %862 = vmatprep.subr.bf16.mxu0 0
        %863 = vmatpush1.bf16.msra.mxu0 0
        %864 = vmatprep.subr.bf16.mxu0 0
        %865 = vmatpush1.bf16.msra.mxu0 0
        %866 = vmatprep.subr.bf16.mxu0 0
        %867 = vmatpush1.bf16.msra.mxu0 0
        %868 = vmatprep.subr.bf16.mxu0 0
        %869 = vmatpush1.bf16.msra.mxu0 0
        %870 = vmatprep.subr.bf16.mxu0 0
        %871 = vmatpush1.bf16.msra.mxu0 0
        %872 = vmatprep.subr.bf16.mxu0 0
        %873 = vmatpush1.bf16.msra.mxu0 0
        %874 = vmatprep.subr.bf16.mxu0 0
        %875 = vmatpush1.bf16.msra.mxu0 0
        %876 = vmatprep.subr.bf16.mxu0 0
        %877 = vmatpush1.bf16.msra.mxu0 0
        %878 = vmatprep.subr.bf16.mxu0 0
        %879 = vmatpush1.bf16.msra.mxu0 0
        %880 = vmatprep.subr.bf16.mxu0 0
        %881 = vmatpush1.bf16.msra.mxu0 0
        %882 = vmatprep.subr.bf16.mxu0 0
        %883 = vmatpush1.bf16.msra.mxu0 0
        %884 = vmatprep.subr.bf16.mxu0 0
        %885 = vmatpush1.bf16.msra.mxu0 0
        %886 = vmatprep.subr.bf16.mxu0 0
        %887 = vmatpush1.bf16.msra.mxu0 0
        %888 = vmatprep.subr.bf16.mxu0 0
        %889 = vmatpush1.bf16.msra.mxu0 0
        %890 = vmatprep.mubr.bf16.mxu0 0
        %891 = vmatmul.mubr.bf16.gmra.mrb[0].mxu0 %v852
        %v892 = vpop.f32.mrb[0].mxu0
        %v893 = vadd.f32 0.0, %v892
        %v894 = vpop.f32.mrb[0].mxu0
        %v895 = vpop.f32.mrb[0].mxu0
        %v896 = vpop.f32.mrb[0].mxu0
        %897 = vdwg.mxu0
        %898 = vrot.lane.b32.xlu0 %v754, 120
        %v899 = vpop.permute.xlu0 %898
        %900 = vrot.lane.b32.xlu0 %v759, 120
        %v901 = vpop.permute.xlu0 %900
        %v902 = vsel %vm761, %v899, 0
        %v904 = vsel %vm761, %v901, 0
        %906 = vmatprep.subr.mxu0 0.0
        %907 = vmatpush1.xpose.msra.mxu0 %v904
        %908 = vmatprep.subr.mxu0 0.0
        %909 = vmatpush1.xpose.msra.mxu0 0.0
        %910 = vmatprep.subr.mxu0 0.0
        %911 = vmatpush1.xpose.msra.mxu0 0.0
        %912 = vmatprep.subr.mxu0 0.0
        %913 = vmatpush1.xpose.msra.mxu0 0.0
        %914 = vmatprep.subr.mxu0 0.0
        %915 = vmatpush1.xpose.msra.mxu0 0.0
        %916 = vmatprep.subr.mxu0 0.0
        %917 = vmatpush1.xpose.msra.mxu0 0.0
        %918 = vmatprep.subr.mxu0 0.0
        %919 = vmatpush1.xpose.msra.mxu0 0.0
        %920 = vmatprep.subr.mxu0 0.0
        %921 = vmatpush1.xpose.msra.mxu0 0.0
        %922 = vmatprep.subr.mxu0 0.0
        %923 = vmatpush1.xpose.msra.mxu0 0.0
        %924 = vmatprep.subr.mxu0 0.0
        %925 = vmatpush1.xpose.msra.mxu0 0.0
        %926 = vmatprep.subr.mxu0 0.0
        %927 = vmatpush1.xpose.msra.mxu0 0.0
        %928 = vmatprep.subr.mxu0 0.0
        %929 = vmatpush1.xpose.msra.mxu0 0.0
        %930 = vmatprep.subr.mxu0 0.0
        %931 = vmatpush1.xpose.msra.mxu0 0.0
        %932 = vmatprep.subr.mxu0 0.0
        %933 = vmatpush1.xpose.msra.mxu0 0.0
        %934 = vmatprep.subr.mxu0 0.0
        %935 = vmatpush1.xpose.msra.mxu0 0.0
        %936 = vmatprep.subr.mxu0 0.0
        %937 = vmatpush1.xpose.msra.mxu0 0.0
        %938 = vmatprep.subr.mxu0 0.0
        %939 = vmatpush1.xpose.msra.mxu0 0.0
        %940 = vmatprep.subr.mxu0 0.0
        %941 = vmatpush1.xpose.msra.mxu0 0.0
        %942 = vmatprep.subr.mxu0 0.0
        %943 = vmatpush1.xpose.msra.mxu0 0.0
        %944 = vmatprep.subr.mxu0 0.0
        %945 = vmatpush1.xpose.msra.mxu0 0.0
        %946 = vmatprep.subr.mxu0 0.0
        %947 = vmatpush1.xpose.msra.mxu0 0.0
        %948 = vmatprep.subr.mxu0 0.0
        %949 = vmatpush1.xpose.msra.mxu0 0.0
        %950 = vmatprep.subr.mxu0 0.0
        %951 = vmatpush1.xpose.msra.mxu0 0.0
        %952 = vmatprep.subr.mxu0 0.0
        %953 = vmatpush1.xpose.msra.mxu0 0.0
        %954 = vmatprep.subr.mxu0 0.0
        %955 = vmatpush1.xpose.msra.mxu0 0.0
        %956 = vmatprep.subr.mxu0 0.0
        %957 = vmatpush1.xpose.msra.mxu0 0.0
        %958 = vmatprep.subr.mxu0 0.0
        %959 = vmatpush1.xpose.msra.mxu0 0.0
        %960 = vmatprep.subr.mxu0 0.0
        %961 = vmatpush1.xpose.msra.mxu0 0.0
        %962 = vmatprep.subr.mxu0 0.0
        %963 = vmatpush1.xpose.msra.mxu0 0.0
        %964 = vmatprep.subr.mxu0 0.0
        %965 = vmatpush1.xpose.msra.mxu0 0.0
        %966 = vmatprep.subr.mxu0 0.0
        %967 = vmatpush1.xpose.msra.mxu0 0.0
        %968 = vmatprep.subr.mxu0 0.0
        %969 = vmatpush1.xpose.msra.mxu0 0.0
        %970 = vmatprep.mubr.f32.mxu0 0.0
        %971 = vmatmul.mubr.f32.gmra.mrb[0].mxu0 %v902
        %v972 = vpop.f32.mrb[0].mxu0
        %v973 = vadd.f32 0.0, %v972
        %v974 = vpop.f32.mrb[0].mxu0
        %975 = vdwg.mxu0
        %v976 = vmul.f32 %v973, 0.35355338
        %v977 = vsel %vm761, %v976, -inf
        %978 = vmax.xlane.f32.xlu0 %v977
        %v979 = vpop.xlane.xlu0 %978
        %v980 = vsub.f32 %v976, %v979
        %v981 = vmul.f32 %v980, 1.442695
        %v982 = vpow.pop %v981
        %v983 = vsel %vm761, %v982, 0.0
        %984 = vadd.xlane.f32.xlu0 %v983
        %v985 = vpop.xlane.xlu0 %984
        %v986 = vrcp.pop %v985
        %v987 = vmul.f32 %v982, %v986
        %v988 = vpack.c.bf16 %v987, %v987
        %v990 = vunpack.c.l.b16 %v760
        %v991 = vpack.c.b16 %v990, %v990
        %992 = vrot.lane.b32.xlu0 %v991, 120
        %v993 = vpop.permute.xlu0 %992
        %v995 = vsel %vm761, %v988, 0
        %v998 = vsel %vm854, %v993, 0
        %1000 = vmatprep.subr.bf16.mxu0 0
        %1001 = vmatpush1.bf16.msra.mxu0 %v998
        %1002 = vmatprep.subr.bf16.mxu0 0
        %1003 = vmatpush1.bf16.msra.mxu0 0
        %1004 = vmatprep.subr.bf16.mxu0 0
        %1005 = vmatpush1.bf16.msra.mxu0 0
        %1006 = vmatprep.subr.bf16.mxu0 0
        %1007 = vmatpush1.bf16.msra.mxu0 0
        %1008 = vmatprep.subr.bf16.mxu0 0
        %1009 = vmatpush1.bf16.msra.mxu0 0
        %1010 = vmatprep.subr.bf16.mxu0 0
        %1011 = vmatpush1.bf16.msra.mxu0 0
        %1012 = vmatprep.subr.bf16.mxu0 0
        %1013 = vmatpush1.bf16.msra.mxu0 0
        %1014 = vmatprep.subr.bf16.mxu0 0
        %1015 = vmatpush1.bf16.msra.mxu0 0
        %1016 = vmatprep.subr.bf16.mxu0 0
        %1017 = vmatpush1.bf16.msra.mxu0 0
        %1018 = vmatprep.subr.bf16.mxu0 0
        %1019 = vmatpush1.bf16.msra.mxu0 0
        %1020 = vmatprep.subr.bf16.mxu0 0
        %1021 = vmatpush1.bf16.msra.mxu0 0
        %1022 = vmatprep.subr.bf16.mxu0 0
        %1023 = vmatpush1.bf16.msra.mxu0 0
        %1024 = vmatprep.subr.bf16.mxu0 0
        %1025 = vmatpush1.bf16.msra.mxu0 0
        %1026 = vmatprep.subr.bf16.mxu0 0
        %1027 = vmatpush1.bf16.msra.mxu0 0
        %1028 = vmatprep.subr.bf16.mxu0 0
        %1029 = vmatpush1.bf16.msra.mxu0 0
        %1030 = vmatprep.subr.bf16.mxu0 0
        %1031 = vmatpush1.bf16.msra.mxu0 0
        %1032 = vmatprep.mubr.bf16.mxu0 0
        %1033 = vmatmul.mubr.bf16.gmra.mrb[0].mxu0 %v995
        %v1034 = vpop.f32.mrb[0].mxu0
        %v1035 = vadd.f32 0.0, %v1034
        %v1036 = vpop.f32.mrb[0].mxu0
        %v1037 = vpop.f32.mrb[0].mxu0
        %v1038 = vpop.f32.mrb[0].mxu0
        %1039 = vdwg.mxu0
        %1040 = vrot.lane.b32.xlu0 %v754, 112
        %v1041 = vpop.permute.xlu0 %1040
        %1042 = vrot.lane.b32.xlu0 %v759, 112
        %v1043 = vpop.permute.xlu0 %1042
        %v1044 = vsel %vm761, %v1041, 0
        %v1046 = vsel %vm761, %v1043, 0
        %1048 = vmatprep.subr.mxu0 0.0
        %1049 = vmatpush1.xpose.msra.mxu0 %v1046
        %1050 = vmatprep.subr.mxu0 0.0
        %1051 = vmatpush1.xpose.msra.mxu0 0.0
        %1052 = vmatprep.subr.mxu0 0.0
        %1053 = vmatpush1.xpose.msra.mxu0 0.0
        %1054 = vmatprep.subr.mxu0 0.0
        %1055 = vmatpush1.xpose.msra.mxu0 0.0
        %1056 = vmatprep.subr.mxu0 0.0
        %1057 = vmatpush1.xpose.msra.mxu0 0.0
        %1058 = vmatprep.subr.mxu0 0.0
        %1059 = vmatpush1.xpose.msra.mxu0 0.0
        %1060 = vmatprep.subr.mxu0 0.0
        %1061 = vmatpush1.xpose.msra.mxu0 0.0
        %1062 = vmatprep.subr.mxu0 0.0
        %1063 = vmatpush1.xpose.msra.mxu0 0.0
        %1064 = vmatprep.subr.mxu0 0.0
        %1065 = vmatpush1.xpose.msra.mxu0 0.0
        %1066 = vmatprep.subr.mxu0 0.0
        %1067 = vmatpush1.xpose.msra.mxu0 0.0
        %1068 = vmatprep.subr.mxu0 0.0
        %1069 = vmatpush1.xpose.msra.mxu0 0.0
        %1070 = vmatprep.subr.mxu0 0.0
        %1071 = vmatpush1.xpose.msra.mxu0 0.0
        %1072 = vmatprep.subr.mxu0 0.0
        %1073 = vmatpush1.xpose.msra.mxu0 0.0
        %1074 = vmatprep.subr.mxu0 0.0
        %1075 = vmatpush1.xpose.msra.mxu0 0.0
        %1076 = vmatprep.subr.mxu0 0.0
        %1077 = vmatpush1.xpose.msra.mxu0 0.0
        %1078 = vmatprep.subr.mxu0 0.0
        %1079 = vmatpush1.xpose.msra.mxu0 0.0
        %1080 = vmatprep.subr.mxu0 0.0
        %1081 = vmatpush1.xpose.msra.mxu0 0.0
        %1082 = vmatprep.subr.mxu0 0.0
        %1083 = vmatpush1.xpose.msra.mxu0 0.0
        %1084 = vmatprep.subr.mxu0 0.0
        %1085 = vmatpush1.xpose.msra.mxu0 0.0
        %1086 = vmatprep.subr.mxu0 0.0
        %1087 = vmatpush1.xpose.msra.mxu0 0.0
        %1088 = vmatprep.subr.mxu0 0.0
        %1089 = vmatpush1.xpose.msra.mxu0 0.0
        %1090 = vmatprep.subr.mxu0 0.0
        %1091 = vmatpush1.xpose.msra.mxu0 0.0
        %1092 = vmatprep.subr.mxu0 0.0
        %1093 = vmatpush1.xpose.msra.mxu0 0.0
        %1094 = vmatprep.subr.mxu0 0.0
        %1095 = vmatpush1.xpose.msra.mxu0 0.0
        %1096 = vmatprep.subr.mxu0 0.0
        %1097 = vmatpush1.xpose.msra.mxu0 0.0
        %1098 = vmatprep.subr.mxu0 0.0
        %1099 = vmatpush1.xpose.msra.mxu0 0.0
        %1100 = vmatprep.subr.mxu0 0.0
        %1101 = vmatpush1.xpose.msra.mxu0 0.0
        %1102 = vmatprep.subr.mxu0 0.0
        %1103 = vmatpush1.xpose.msra.mxu0 0.0
        %1104 = vmatprep.subr.mxu0 0.0
        %1105 = vmatpush1.xpose.msra.mxu0 0.0
        %1106 = vmatprep.subr.mxu0 0.0
        %1107 = vmatpush1.xpose.msra.mxu0 0.0
        %1108 = vmatprep.subr.mxu0 0.0
        %1109 = vmatpush1.xpose.msra.mxu0 0.0
        %1110 = vmatprep.subr.mxu0 0.0
        %1111 = vmatpush1.xpose.msra.mxu0 0.0
        %1112 = vmatprep.mubr.f32.mxu0 0.0
        %1113 = vmatmul.mubr.f32.gmra.mrb[0].mxu0 %v1044
        %v1114 = vpop.f32.mrb[0].mxu0
        %v1115 = vadd.f32 0.0, %v1114
        %v1116 = vpop.f32.mrb[0].mxu0
        %1117 = vdwg.mxu0
        %v1118 = vmul.f32 %v1115, 0.35355338
        %v1119 = vsel %vm761, %v1118, -inf
        %1120 = vmax.xlane.f32.xlu0 %v1119
        %v1121 = vpop.xlane.xlu0 %1120
        %v1122 = vsub.f32 %v1118, %v1121
        %v1123 = vmul.f32 %v1122, 1.442695
        %v1124 = vpow.pop %v1123
        %v1125 = vsel %vm761, %v1124, 0.0
        %1126 = vadd.xlane.f32.xlu0 %v1125
        %v1127 = vpop.xlane.xlu0 %1126
        %v1128 = vrcp.pop %v1127
        %v1129 = vmul.f32 %v1124, %v1128
        %v1130 = vpack.c.bf16 %v1129, %v1129
        %1131 = vrot.lane.b32.xlu0 %v991, 112
        %v1132 = vpop.permute.xlu0 %1131
        %v1134 = vsel %vm761, %v1130, 0
        %v1137 = vsel %vm854, %v1132, 0
        %1139 = vmatprep.subr.bf16.mxu0 0
        %1140 = vmatpush1.bf16.msra.mxu0 %v1137
        %1141 = vmatprep.subr.bf16.mxu0 0
        %1142 = vmatpush1.bf16.msra.mxu0 0
        %1143 = vmatprep.subr.bf16.mxu0 0
        %1144 = vmatpush1.bf16.msra.mxu0 0
        %1145 = vmatprep.subr.bf16.mxu0 0
        %1146 = vmatpush1.bf16.msra.mxu0 0
        %1147 = vmatprep.subr.bf16.mxu0 0
        %1148 = vmatpush1.bf16.msra.mxu0 0
        %1149 = vmatprep.subr.bf16.mxu0 0
        %1150 = vmatpush1.bf16.msra.mxu0 0
        %1151 = vmatprep.subr.bf16.mxu0 0
        %1152 = vmatpush1.bf16.msra.mxu0 0
        %1153 = vmatprep.subr.bf16.mxu0 0
        %1154 = vmatpush1.bf16.msra.mxu0 0
        %1155 = vmatprep.subr.bf16.mxu0 0
        %1156 = vmatpush1.bf16.msra.mxu0 0
        %1157 = vmatprep.subr.bf16.mxu0 0
        %1158 = vmatpush1.bf16.msra.mxu0 0
        %1159 = vmatprep.subr.bf16.mxu0 0
        %1160 = vmatpush1.bf16.msra.mxu0 0
        %1161 = vmatprep.subr.bf16.mxu0 0
        %1162 = vmatpush1.bf16.msra.mxu0 0
        %1163 = vmatprep.subr.bf16.mxu0 0
        %1164 = vmatpush1.bf16.msra.mxu0 0
        %1165 = vmatprep.subr.bf16.mxu0 0
        %1166 = vmatpush1.bf16.msra.mxu0 0
        %1167 = vmatprep.subr.bf16.mxu0 0
        %1168 = vmatpush1.bf16.msra.mxu0 0
        %1169 = vmatprep.subr.bf16.mxu0 0
        %1170 = vmatpush1.bf16.msra.mxu0 0
        %1171 = vmatprep.mubr.bf16.mxu0 0
        %1172 = vmatmul.mubr.bf16.gmra.mrb[0].mxu0 %v1134
        %v1173 = vpop.f32.mrb[0].mxu0
        %v1174 = vadd.f32 0.0, %v1173
        %v1175 = vpop.f32.mrb[0].mxu0
        %v1176 = vpop.f32.mrb[0].mxu0
        %v1177 = vpop.f32.mrb[0].mxu0
        %1178 = vdwg.mxu0
        %1179 = vrot.lane.b32.xlu0 %v754, 104
        %v1180 = vpop.permute.xlu0 %1179
        %1181 = vrot.lane.b32.xlu0 %v759, 104
        %v1182 = vpop.permute.xlu0 %1181
        %v1183 = vsel %vm761, %v1180, 0
        %v1185 = vsel %vm761, %v1182, 0
        %1187 = vmatprep.subr.mxu0 0.0
        %1188 = vmatpush1.xpose.msra.mxu0 %v1185
        %1189 = vmatprep.subr.mxu0 0.0
        %1190 = vmatpush1.xpose.msra.mxu0 0.0
        %1191 = vmatprep.subr.mxu0 0.0
        %1192 = vmatpush1.xpose.msra.mxu0 0.0
        %1193 = vmatprep.subr.mxu0 0.0
        %1194 = vmatpush1.xpose.msra.mxu0 0.0
        %1195 = vmatprep.subr.mxu0 0.0
        %1196 = vmatpush1.xpose.msra.mxu0 0.0
        %1197 = vmatprep.subr.mxu0 0.0
        %1198 = vmatpush1.xpose.msra.mxu0 0.0
        %1199 = vmatprep.subr.mxu0 0.0
        %1200 = vmatpush1.xpose.msra.mxu0 0.0
        %1201 = vmatprep.subr.mxu0 0.0
        %1202 = vmatpush1.xpose.msra.mxu0 0.0
        %1203 = vmatprep.subr.mxu0 0.0
        %1204 = vmatpush1.xpose.msra.mxu0 0.0
        %1205 = vmatprep.subr.mxu0 0.0
        %1206 = vmatpush1.xpose.msra.mxu0 0.0
        %1207 = vmatprep.subr.mxu0 0.0
        %1208 = vmatpush1.xpose.msra.mxu0 0.0
        %1209 = vmatprep.subr.mxu0 0.0
        %1210 = vmatpush1.xpose.msra.mxu0 0.0
        %1211 = vmatprep.subr.mxu0 0.0
        %1212 = vmatpush1.xpose.msra.mxu0 0.0
        %1213 = vmatprep.subr.mxu0 0.0
        %1214 = vmatpush1.xpose.msra.mxu0 0.0
        %1215 = vmatprep.subr.mxu0 0.0
        %1216 = vmatpush1.xpose.msra.mxu0 0.0
        %1217 = vmatprep.subr.mxu0 0.0
        %1218 = vmatpush1.xpose.msra.mxu0 0.0
        %1219 = vmatprep.subr.mxu0 0.0
        %1220 = vmatpush1.xpose.msra.mxu0 0.0
        %1221 = vmatprep.subr.mxu0 0.0
        %1222 = vmatpush1.xpose.msra.mxu0 0.0
        %1223 = vmatprep.subr.mxu0 0.0
        %1224 = vmatpush1.xpose.msra.mxu0 0.0
        %1225 = vmatprep.subr.mxu0 0.0
        %1226 = vmatpush1.xpose.msra.mxu0 0.0
        %1227 = vmatprep.subr.mxu0 0.0
        %1228 = vmatpush1.xpose.msra.mxu0 0.0
        %1229 = vmatprep.subr.mxu0 0.0
        %1230 = vmatpush1.xpose.msra.mxu0 0.0
        %1231 = vmatprep.subr.mxu0 0.0
        %1232 = vmatpush1.xpose.msra.mxu0 0.0
        %1233 = vmatprep.subr.mxu0 0.0
        %1234 = vmatpush1.xpose.msra.mxu0 0.0
        %1235 = vmatprep.subr.mxu0 0.0
        %1236 = vmatpush1.xpose.msra.mxu0 0.0
        %1237 = vmatprep.subr.mxu0 0.0
        %1238 = vmatpush1.xpose.msra.mxu0 0.0
        %1239 = vmatprep.subr.mxu0 0.0
        %1240 = vmatpush1.xpose.msra.mxu0 0.0
        %1241 = vmatprep.subr.mxu0 0.0
        %1242 = vmatpush1.xpose.msra.mxu0 0.0
        %1243 = vmatprep.subr.mxu0 0.0
        %1244 = vmatpush1.xpose.msra.mxu0 0.0
        %1245 = vmatprep.subr.mxu0 0.0
        %1246 = vmatpush1.xpose.msra.mxu0 0.0
        %1247 = vmatprep.subr.mxu0 0.0
        %1248 = vmatpush1.xpose.msra.mxu0 0.0
        %1249 = vmatprep.subr.mxu0 0.0
        %1250 = vmatpush1.xpose.msra.mxu0 0.0
        %1251 = vmatprep.mubr.f32.mxu0 0.0
        %1252 = vmatmul.mubr.f32.gmra.mrb[0].mxu0 %v1183
        %v1253 = vpop.f32.mrb[0].mxu0
        %v1254 = vadd.f32 0.0, %v1253
        %v1255 = vpop.f32.mrb[0].mxu0
        %1256 = vdwg.mxu0
        %v1257 = vmul.f32 %v1254, 0.35355338
        %v1258 = vsel %vm761, %v1257, -inf
        %1259 = vmax.xlane.f32.xlu0 %v1258
        %v1260 = vpop.xlane.xlu0 %1259
        %v1261 = vsub.f32 %v1257, %v1260
        %v1262 = vmul.f32 %v1261, 1.442695
        %v1263 = vpow.pop %v1262
        %v1264 = vsel %vm761, %v1263, 0.0
        %1265 = vadd.xlane.f32.xlu0 %v1264
        %v1266 = vpop.xlane.xlu0 %1265
        %v1267 = vrcp.pop %v1266
        %v1268 = vmul.f32 %v1263, %v1267
        %v1269 = vpack.c.bf16 %v1268, %v1268
        %1270 = vrot.lane.b32.xlu0 %v991, 104
        %v1271 = vpop.permute.xlu0 %1270
        %v1273 = vsel %vm761, %v1269, 0
        %v1276 = vsel %vm854, %v1271, 0
        %1278 = vmatprep.subr.bf16.mxu0 0
        %1279 = vmatpush1.bf16.msra.mxu0 %v1276
        %1280 = vmatprep.subr.bf16.mxu0 0
        %1281 = vmatpush1.bf16.msra.mxu0 0
        %1282 = vmatprep.subr.bf16.mxu0 0
        %1283 = vmatpush1.bf16.msra.mxu0 0
        %1284 = vmatprep.subr.bf16.mxu0 0
        %1285 = vmatpush1.bf16.msra.mxu0 0
        %1286 = vmatprep.subr.bf16.mxu0 0
        %1287 = vmatpush1.bf16.msra.mxu0 0
        %1288 = vmatprep.subr.bf16.mxu0 0
        %1289 = vmatpush1.bf16.msra.mxu0 0
        %1290 = vmatprep.subr.bf16.mxu0 0
        %1291 = vmatpush1.bf16.msra.mxu0 0
        %1292 = vmatprep.subr.bf16.mxu0 0
        %1293 = vmatpush1.bf16.msra.mxu0 0
        %1294 = vmatprep.subr.bf16.mxu0 0
        %1295 = vmatpush1.bf16.msra.mxu0 0
        %1296 = vmatprep.subr.bf16.mxu0 0
        %1297 = vmatpush1.bf16.msra.mxu0 0
        %1298 = vmatprep.subr.bf16.mxu0 0
        %1299 = vmatpush1.bf16.msra.mxu0 0
        %1300 = vmatprep.subr.bf16.mxu0 0
        %1301 = vmatpush1.bf16.msra.mxu0 0
        %1302 = vmatprep.subr.bf16.mxu0 0
        %1303 = vmatpush1.bf16.msra.mxu0 0
        %1304 = vmatprep.subr.bf16.mxu0 0
        %1305 = vmatpush1.bf16.msra.mxu0 0
        %1306 = vmatprep.subr.bf16.mxu0 0
        %1307 = vmatpush1.bf16.msra.mxu0 0
        %1308 = vmatprep.subr.bf16.mxu0 0
        %1309 = vmatpush1.bf16.msra.mxu0 0
        %1310 = vmatprep.mubr.bf16.mxu0 0
        %1311 = vmatmul.mubr.bf16.gmra.mrb[0].mxu0 %v1273
        %v1312 = vpop.f32.mrb[0].mxu0
        %v1313 = vadd.f32 0.0, %v1312
        %v1314 = vpop.f32.mrb[0].mxu0
        %v1315 = vpop.f32.mrb[0].mxu0
        %v1316 = vpop.f32.mrb[0].mxu0
        %1317 = vdwg.mxu0
        %1318 = vrot.lane.b32.xlu0 %v754, 96
        %v1319 = vpop.permute.xlu0 %1318
        %1320 = vrot.lane.b32.xlu0 %v759, 96
        %v1321 = vpop.permute.xlu0 %1320
        %v1322 = vsel %vm761, %v1319, 0
        %v1324 = vsel %vm761, %v1321, 0
        %1326 = vmatprep.subr.mxu0 0.0
        %1327 = vmatpush1.xpose.msra.mxu0 %v1324
        %1328 = vmatprep.subr.mxu0 0.0
        %1329 = vmatpush1.xpose.msra.mxu0 0.0
        %1330 = vmatprep.subr.mxu0 0.0
        %1331 = vmatpush1.xpose.msra.mxu0 0.0
        %1332 = vmatprep.subr.mxu0 0.0
        %1333 = vmatpush1.xpose.msra.mxu0 0.0
        %1334 = vmatprep.subr.mxu0 0.0
        %1335 = vmatpush1.xpose.msra.mxu0 0.0
        %1336 = vmatprep.subr.mxu0 0.0
        %1337 = vmatpush1.xpose.msra.mxu0 0.0
        %1338 = vmatprep.subr.mxu0 0.0
        %1339 = vmatpush1.xpose.msra.mxu0 0.0
        %1340 = vmatprep.subr.mxu0 0.0
        %1341 = vmatpush1.xpose.msra.mxu0 0.0
        %1342 = vmatprep.subr.mxu0 0.0
        %1343 = vmatpush1.xpose.msra.mxu0 0.0
        %1344 = vmatprep.subr.mxu0 0.0
        %1345 = vmatpush1.xpose.msra.mxu0 0.0
        %1346 = vmatprep.subr.mxu0 0.0
        %1347 = vmatpush1.xpose.msra.mxu0 0.0
        %1348 = vmatprep.subr.mxu0 0.0
        %1349 = vmatpush1.xpose.msra.mxu0 0.0
        %1350 = vmatprep.subr.mxu0 0.0
        %1351 = vmatpush1.xpose.msra.mxu0 0.0
        %1352 = vmatprep.subr.mxu0 0.0
        %1353 = vmatpush1.xpose.msra.mxu0 0.0
        %1354 = vmatprep.subr.mxu0 0.0
        %1355 = vmatpush1.xpose.msra.mxu0 0.0
        %1356 = vmatprep.subr.mxu0 0.0
        %1357 = vmatpush1.xpose.msra.mxu0 0.0
        %1358 = vmatprep.subr.mxu0 0.0
        %1359 = vmatpush1.xpose.msra.mxu0 0.0
        %1360 = vmatprep.subr.mxu0 0.0
        %1361 = vmatpush1.xpose.msra.mxu0 0.0
        %1362 = vmatprep.subr.mxu0 0.0
        %1363 = vmatpush1.xpose.msra.mxu0 0.0
        %1364 = vmatprep.subr.mxu0 0.0
        %1365 = vmatpush1.xpose.msra.mxu0 0.0
        %1366 = vmatprep.subr.mxu0 0.0
        %1367 = vmatpush1.xpose.msra.mxu0 0.0
        %1368 = vmatprep.subr.mxu0 0.0
        %1369 = vmatpush1.xpose.msra.mxu0 0.0
        %1370 = vmatprep.subr.mxu0 0.0
        %1371 = vmatpush1.xpose.msra.mxu0 0.0
        %1372 = vmatprep.subr.mxu0 0.0
        %1373 = vmatpush1.xpose.msra.mxu0 0.0
        %1374 = vmatprep.subr.mxu0 0.0
        %1375 = vmatpush1.xpose.msra.mxu0 0.0
        %1376 = vmatprep.subr.mxu0 0.0
        %1377 = vmatpush1.xpose.msra.mxu0 0.0
        %1378 = vmatprep.subr.mxu0 0.0
        %1379 = vmatpush1.xpose.msra.mxu0 0.0
        %1380 = vmatprep.subr.mxu0 0.0
        %1381 = vmatpush1.xpose.msra.mxu0 0.0
        %1382 = vmatprep.subr.mxu0 0.0
        %1383 = vmatpush1.xpose.msra.mxu0 0.0
        %1384 = vmatprep.subr.mxu0 0.0
        %1385 = vmatpush1.xpose.msra.mxu0 0.0
        %1386 = vmatprep.subr.mxu0 0.0
        %1387 = vmatpush1.xpose.msra.mxu0 0.0
        %1388 = vmatprep.subr.mxu0 0.0
        %1389 = vmatpush1.xpose.msra.mxu0 0.0
        %1390 = vmatprep.mubr.f32.mxu0 0.0
        %1391 = vmatmul.mubr.f32.gmra.mrb[0].mxu0 %v1322
        %v1392 = vpop.f32.mrb[0].mxu0
        %v1393 = vadd.f32 0.0, %v1392
        %v1394 = vpop.f32.mrb[0].mxu0
        %1395 = vdwg.mxu0
        %v1396 = vmul.f32 %v1393, 0.35355338
        %v1397 = vsel %vm761, %v1396, -inf
        %1398 = vmax.xlane.f32.xlu0 %v1397
        %v1399 = vpop.xlane.xlu0 %1398
        %v1400 = vsub.f32 %v1396, %v1399
        %v1401 = vmul.f32 %v1400, 1.442695
        %v1402 = vpow.pop %v1401
        %v1403 = vsel %vm761, %v1402, 0.0
        %1404 = vadd.xlane.f32.xlu0 %v1403
        %v1405 = vpop.xlane.xlu0 %1404
        %v1406 = vrcp.pop %v1405
        %v1407 = vmul.f32 %v1402, %v1406
        %v1408 = vpack.c.bf16 %v1407, %v1407
        %1409 = vrot.lane.b32.xlu0 %v991, 96
        %v1410 = vpop.permute.xlu0 %1409
        %v1412 = vsel %vm761, %v1408, 0
        %v1415 = vsel %vm854, %v1410, 0
        %1417 = vmatprep.subr.bf16.mxu0 0
        %1418 = vmatpush1.bf16.msra.mxu0 %v1415
        %1419 = vmatprep.subr.bf16.mxu0 0
        %1420 = vmatpush1.bf16.msra.mxu0 0
        %1421 = vmatprep.subr.bf16.mxu0 0
        %1422 = vmatpush1.bf16.msra.mxu0 0
        %1423 = vmatprep.subr.bf16.mxu0 0
        %1424 = vmatpush1.bf16.msra.mxu0 0
        %1425 = vmatprep.subr.bf16.mxu0 0
        %1426 = vmatpush1.bf16.msra.mxu0 0
        %1427 = vmatprep.subr.bf16.mxu0 0
        %1428 = vmatpush1.bf16.msra.mxu0 0
        %1429 = vmatprep.subr.bf16.mxu0 0
        %1430 = vmatpush1.bf16.msra.mxu0 0
        %1431 = vmatprep.subr.bf16.mxu0 0
        %1432 = vmatpush1.bf16.msra.mxu0 0
        %1433 = vmatprep.subr.bf16.mxu0 0
        %1434 = vmatpush1.bf16.msra.mxu0 0
        %1435 = vmatprep.subr.bf16.mxu0 0
        %1436 = vmatpush1.bf16.msra.mxu0 0
        %1437 = vmatprep.subr.bf16.mxu0 0
        %1438 = vmatpush1.bf16.msra.mxu0 0
        %1439 = vmatprep.subr.bf16.mxu0 0
        %1440 = vmatpush1.bf16.msra.mxu0 0
        %1441 = vmatprep.subr.bf16.mxu0 0
        %1442 = vmatpush1.bf16.msra.mxu0 0
        %1443 = vmatprep.subr.bf16.mxu0 0
        %1444 = vmatpush1.bf16.msra.mxu0 0
        %1445 = vmatprep.subr.bf16.mxu0 0
        %1446 = vmatpush1.bf16.msra.mxu0 0
        %1447 = vmatprep.subr.bf16.mxu0 0
        %1448 = vmatpush1.bf16.msra.mxu0 0
        %1449 = vmatprep.mubr.bf16.mxu0 0
        %1450 = vmatmul.mubr.bf16.gmra.mrb[0].mxu0 %v1412
        %v1451 = vpop.f32.mrb[0].mxu0
        %v1452 = vadd.f32 0.0, %v1451
        %v1453 = vpop.f32.mrb[0].mxu0
        %v1454 = vpop.f32.mrb[0].mxu0
        %v1455 = vpop.f32.mrb[0].mxu0
        %1456 = vdwg.mxu0
        %1457 = vrot.lane.b32.xlu0 %v754, 88
        %v1458 = vpop.permute.xlu0 %1457
        %1459 = vrot.lane.b32.xlu0 %v759, 88
        %v1460 = vpop.permute.xlu0 %1459
        %v1461 = vsel %vm761, %v1458, 0
        %v1463 = vsel %vm761, %v1460, 0
        %1465 = vmatprep.subr.mxu0 0.0
        %1466 = vmatpush1.xpose.msra.mxu0 %v1463
        %1467 = vmatprep.subr.mxu0 0.0
        %1468 = vmatpush1.xpose.msra.mxu0 0.0
        %1469 = vmatprep.subr.mxu0 0.0
        %1470 = vmatpush1.xpose.msra.mxu0 0.0
        %1471 = vmatprep.subr.mxu0 0.0
        %1472 = vmatpush1.xpose.msra.mxu0 0.0
        %1473 = vmatprep.subr.mxu0 0.0
        %1474 = vmatpush1.xpose.msra.mxu0 0.0
        %1475 = vmatprep.subr.mxu0 0.0
        %1476 = vmatpush1.xpose.msra.mxu0 0.0
        %1477 = vmatprep.subr.mxu0 0.0
        %1478 = vmatpush1.xpose.msra.mxu0 0.0
        %1479 = vmatprep.subr.mxu0 0.0
        %1480 = vmatpush1.xpose.msra.mxu0 0.0
        %1481 = vmatprep.subr.mxu0 0.0
        %1482 = vmatpush1.xpose.msra.mxu0 0.0
        %1483 = vmatprep.subr.mxu0 0.0
        %1484 = vmatpush1.xpose.msra.mxu0 0.0
        %1485 = vmatprep.subr.mxu0 0.0
        %1486 = vmatpush1.xpose.msra.mxu0 0.0
        %1487 = vmatprep.subr.mxu0 0.0
        %1488 = vmatpush1.xpose.msra.mxu0 0.0
        %1489 = vmatprep.subr.mxu0 0.0
        %1490 = vmatpush1.xpose.msra.mxu0 0.0
        %1491 = vmatprep.subr.mxu0 0.0
        %1492 = vmatpush1.xpose.msra.mxu0 0.0
        %1493 = vmatprep.subr.mxu0 0.0
        %1494 = vmatpush1.xpose.msra.mxu0 0.0
        %1495 = vmatprep.subr.mxu0 0.0
        %1496 = vmatpush1.xpose.msra.mxu0 0.0
        %1497 = vmatprep.subr.mxu0 0.0
        %1498 = vmatpush1.xpose.msra.mxu0 0.0
        %1499 = vmatprep.subr.mxu0 0.0
        %1500 = vmatpush1.xpose.msra.mxu0 0.0
        %1501 = vmatprep.subr.mxu0 0.0
        %1502 = vmatpush1.xpose.msra.mxu0 0.0
        %1503 = vmatprep.subr.mxu0 0.0
        %1504 = vmatpush1.xpose.msra.mxu0 0.0
        %1505 = vmatprep.subr.mxu0 0.0
        %1506 = vmatpush1.xpose.msra.mxu0 0.0
        %1507 = vmatprep.subr.mxu0 0.0
        %1508 = vmatpush1.xpose.msra.mxu0 0.0
        %1509 = vmatprep.subr.mxu0 0.0
        %1510 = vmatpush1.xpose.msra.mxu0 0.0
        %1511 = vmatprep.subr.mxu0 0.0
        %1512 = vmatpush1.xpose.msra.mxu0 0.0
        %1513 = vmatprep.subr.mxu0 0.0
        %1514 = vmatpush1.xpose.msra.mxu0 0.0
        %1515 = vmatprep.subr.mxu0 0.0
        %1516 = vmatpush1.xpose.msra.mxu0 0.0
        %1517 = vmatprep.subr.mxu0 0.0
        %1518 = vmatpush1.xpose.msra.mxu0 0.0
        %1519 = vmatprep.subr.mxu0 0.0
        %1520 = vmatpush1.xpose.msra.mxu0 0.0
        %1521 = vmatprep.subr.mxu0 0.0
        %1522 = vmatpush1.xpose.msra.mxu0 0.0
        %1523 = vmatprep.subr.mxu0 0.0
        %1524 = vmatpush1.xpose.msra.mxu0 0.0
        %1525 = vmatprep.subr.mxu0 0.0
        %1526 = vmatpush1.xpose.msra.mxu0 0.0
        %1527 = vmatprep.subr.mxu0 0.0
        %1528 = vmatpush1.xpose.msra.mxu0 0.0
        %1529 = vmatprep.mubr.f32.mxu0 0.0
        %1530 = vmatmul.mubr.f32.gmra.mrb[0].mxu0 %v1461
        %v1531 = vpop.f32.mrb[0].mxu0
        %v1532 = vadd.f32 0.0, %v1531
        %v1533 = vpop.f32.mrb[0].mxu0
        %1534 = vdwg.mxu0
        %v1535 = vmul.f32 %v1532, 0.35355338
        %v1536 = vsel %vm761, %v1535, -inf
        %1537 = vmax.xlane.f32.xlu0 %v1536
        %v1538 = vpop.xlane.xlu0 %1537
        %v1539 = vsub.f32 %v1535, %v1538
        %v1540 = vmul.f32 %v1539, 1.442695
        %v1541 = vpow.pop %v1540
        %v1542 = vsel %vm761, %v1541, 0.0
        %1543 = vadd.xlane.f32.xlu0 %v1542
        %v1544 = vpop.xlane.xlu0 %1543
        %v1545 = vrcp.pop %v1544
        %v1546 = vmul.f32 %v1541, %v1545
        %v1547 = vpack.c.bf16 %v1546, %v1546
        %1548 = vrot.lane.b32.xlu0 %v991, 88
        %v1549 = vpop.permute.xlu0 %1548
        %v1551 = vsel %vm761, %v1547, 0
        %v1554 = vsel %vm854, %v1549, 0
        %1556 = vmatprep.subr.bf16.mxu0 0
        %1557 = vmatpush1.bf16.msra.mxu0 %v1554
        %1558 = vmatprep.subr.bf16.mxu0 0
        %1559 = vmatpush1.bf16.msra.mxu0 0
        %1560 = vmatprep.subr.bf16.mxu0 0
        %1561 = vmatpush1.bf16.msra.mxu0 0
        %1562 = vmatprep.subr.bf16.mxu0 0
        %1563 = vmatpush1.bf16.msra.mxu0 0
        %1564 = vmatprep.subr.bf16.mxu0 0
        %1565 = vmatpush1.bf16.msra.mxu0 0
        %1566 = vmatprep.subr.bf16.mxu0 0
        %1567 = vmatpush1.bf16.msra.mxu0 0
        %1568 = vmatprep.subr.bf16.mxu0 0
        %1569 = vmatpush1.bf16.msra.mxu0 0
        %1570 = vmatprep.subr.bf16.mxu0 0
        %1571 = vmatpush1.bf16.msra.mxu0 0
        %1572 = vmatprep.subr.bf16.mxu0 0
        %1573 = vmatpush1.bf16.msra.mxu0 0
        %1574 = vmatprep.subr.bf16.mxu0 0
        %1575 = vmatpush1.bf16.msra.mxu0 0
        %1576 = vmatprep.subr.bf16.mxu0 0
        %1577 = vmatpush1.bf16.msra.mxu0 0
        %1578 = vmatprep.subr.bf16.mxu0 0
        %1579 = vmatpush1.bf16.msra.mxu0 0
        %1580 = vmatprep.subr.bf16.mxu0 0
        %1581 = vmatpush1.bf16.msra.mxu0 0
        %1582 = vmatprep.subr.bf16.mxu0 0
        %1583 = vmatpush1.bf16.msra.mxu0 0
        %1584 = vmatprep.subr.bf16.mxu0 0
        %1585 = vmatpush1.bf16.msra.mxu0 0
        %1586 = vmatprep.subr.bf16.mxu0 0
        %1587 = vmatpush1.bf16.msra.mxu0 0
        %1588 = vmatprep.mubr.bf16.mxu0 0
        %1589 = vmatmul.mubr.bf16.gmra.mrb[0].mxu0 %v1551
        %v1590 = vpop.f32.mrb[0].mxu0
        %v1591 = vadd.f32 0.0, %v1590
        %v1592 = vpop.f32.mrb[0].mxu0
        %v1593 = vpop.f32.mrb[0].mxu0
        %v1594 = vpop.f32.mrb[0].mxu0
        %1595 = vdwg.mxu0
        %1596 = vrot.lane.b32.xlu0 %v754, 80
        %v1597 = vpop.permute.xlu0 %1596
        %1598 = vrot.lane.b32.xlu0 %v759, 80
        %v1599 = vpop.permute.xlu0 %1598
        %v1600 = vsel %vm761, %v1597, 0
        %v1602 = vsel %vm761, %v1599, 0
        %1604 = vmatprep.subr.mxu0 0.0
        %1605 = vmatpush1.xpose.msra.mxu0 %v1602
        %1606 = vmatprep.subr.mxu0 0.0
        %1607 = vmatpush1.xpose.msra.mxu0 0.0
        %1608 = vmatprep.subr.mxu0 0.0
        %1609 = vmatpush1.xpose.msra.mxu0 0.0
        %1610 = vmatprep.subr.mxu0 0.0
        %1611 = vmatpush1.xpose.msra.mxu0 0.0
        %1612 = vmatprep.subr.mxu0 0.0
        %1613 = vmatpush1.xpose.msra.mxu0 0.0
        %1614 = vmatprep.subr.mxu0 0.0
        %1615 = vmatpush1.xpose.msra.mxu0 0.0
        %1616 = vmatprep.subr.mxu0 0.0
        %1617 = vmatpush1.xpose.msra.mxu0 0.0
        %1618 = vmatprep.subr.mxu0 0.0
        %1619 = vmatpush1.xpose.msra.mxu0 0.0
        %1620 = vmatprep.subr.mxu0 0.0
        %1621 = vmatpush1.xpose.msra.mxu0 0.0
        %1622 = vmatprep.subr.mxu0 0.0
        %1623 = vmatpush1.xpose.msra.mxu0 0.0
        %1624 = vmatprep.subr.mxu0 0.0
        %1625 = vmatpush1.xpose.msra.mxu0 0.0
        %1626 = vmatprep.subr.mxu0 0.0
        %1627 = vmatpush1.xpose.msra.mxu0 0.0
        %1628 = vmatprep.subr.mxu0 0.0
        %1629 = vmatpush1.xpose.msra.mxu0 0.0
        %1630 = vmatprep.subr.mxu0 0.0
        %1631 = vmatpush1.xpose.msra.mxu0 0.0
        %1632 = vmatprep.subr.mxu0 0.0
        %1633 = vmatpush1.xpose.msra.mxu0 0.0
        %1634 = vmatprep.subr.mxu0 0.0
        %1635 = vmatpush1.xpose.msra.mxu0 0.0
        %1636 = vmatprep.subr.mxu0 0.0
        %1637 = vmatpush1.xpose.msra.mxu0 0.0
        %1638 = vmatprep.subr.mxu0 0.0
        %1639 = vmatpush1.xpose.msra.mxu0 0.0
        %1640 = vmatprep.subr.mxu0 0.0
        %1641 = vmatpush1.xpose.msra.mxu0 0.0
        %1642 = vmatprep.subr.mxu0 0.0
        %1643 = vmatpush1.xpose.msra.mxu0 0.0
        %1644 = vmatprep.subr.mxu0 0.0
        %1645 = vmatpush1.xpose.msra.mxu0 0.0
        %1646 = vmatprep.subr.mxu0 0.0
        %1647 = vmatpush1.xpose.msra.mxu0 0.0
        %1648 = vmatprep.subr.mxu0 0.0
        %1649 = vmatpush1.xpose.msra.mxu0 0.0
        %1650 = vmatprep.subr.mxu0 0.0
        %1651 = vmatpush1.xpose.msra.mxu0 0.0
        %1652 = vmatprep.subr.mxu0 0.0
        %1653 = vmatpush1.xpose.msra.mxu0 0.0
        %1654 = vmatprep.subr.mxu0 0.0
        %1655 = vmatpush1.xpose.msra.mxu0 0.0
        %1656 = vmatprep.subr.mxu0 0.0
        %1657 = vmatpush1.xpose.msra.mxu0 0.0
        %1658 = vmatprep.subr.mxu0 0.0
        %1659 = vmatpush1.xpose.msra.mxu0 0.0
        %1660 = vmatprep.subr.mxu0 0.0
        %1661 = vmatpush1.xpose.msra.mxu0 0.0
        %1662 = vmatprep.subr.mxu0 0.0
        %1663 = vmatpush1.xpose.msra.mxu0 0.0
        %1664 = vmatprep.subr.mxu0 0.0
        %1665 = vmatpush1.xpose.msra.mxu0 0.0
        %1666 = vmatprep.subr.mxu0 0.0
        %1667 = vmatpush1.xpose.msra.mxu0 0.0
        %1668 = vmatprep.mubr.f32.mxu0 0.0
        %1669 = vmatmul.mubr.f32.gmra.mrb[0].mxu0 %v1600
        %v1670 = vpop.f32.mrb[0].mxu0
        %v1671 = vadd.f32 0.0, %v1670
        %v1672 = vpop.f32.mrb[0].mxu0
        %1673 = vdwg.mxu0
        %v1674 = vmul.f32 %v1671, 0.35355338
        %v1675 = vsel %vm761, %v1674, -inf
        %1676 = vmax.xlane.f32.xlu0 %v1675
        %v1677 = vpop.xlane.xlu0 %1676
        %v1678 = vsub.f32 %v1674, %v1677
        %v1679 = vmul.f32 %v1678, 1.442695
        %v1680 = vpow.pop %v1679
        %v1681 = vsel %vm761, %v1680, 0.0
        %1682 = vadd.xlane.f32.xlu0 %v1681
        %v1683 = vpop.xlane.xlu0 %1682
        %v1684 = vrcp.pop %v1683
        %v1685 = vmul.f32 %v1680, %v1684
        %v1686 = vpack.c.bf16 %v1685, %v1685
        %1687 = vrot.lane.b32.xlu0 %v991, 80
        %v1688 = vpop.permute.xlu0 %1687
        %v1690 = vsel %vm761, %v1686, 0
        %v1693 = vsel %vm854, %v1688, 0
        %1695 = vmatprep.subr.bf16.mxu0 0
        %1696 = vmatpush1.bf16.msra.mxu0 %v1693
        %1697 = vmatprep.subr.bf16.mxu0 0
        %1698 = vmatpush1.bf16.msra.mxu0 0
        %1699 = vmatprep.subr.bf16.mxu0 0
        %1700 = vmatpush1.bf16.msra.mxu0 0
        %1701 = vmatprep.subr.bf16.mxu0 0
        %1702 = vmatpush1.bf16.msra.mxu0 0
        %1703 = vmatprep.subr.bf16.mxu0 0
        %1704 = vmatpush1.bf16.msra.mxu0 0
        %1705 = vmatprep.subr.bf16.mxu0 0
        %1706 = vmatpush1.bf16.msra.mxu0 0
        %1707 = vmatprep.subr.bf16.mxu0 0
        %1708 = vmatpush1.bf16.msra.mxu0 0
        %1709 = vmatprep.subr.bf16.mxu0 0
        %1710 = vmatpush1.bf16.msra.mxu0 0
        %1711 = vmatprep.subr.bf16.mxu0 0
        %1712 = vmatpush1.bf16.msra.mxu0 0
        %1713 = vmatprep.subr.bf16.mxu0 0
        %1714 = vmatpush1.bf16.msra.mxu0 0
        %1715 = vmatprep.subr.bf16.mxu0 0
        %1716 = vmatpush1.bf16.msra.mxu0 0
        %1717 = vmatprep.subr.bf16.mxu0 0
        %1718 = vmatpush1.bf16.msra.mxu0 0
        %1719 = vmatprep.subr.bf16.mxu0 0
        %1720 = vmatpush1.bf16.msra.mxu0 0
        %1721 = vmatprep.subr.bf16.mxu0 0
        %1722 = vmatpush1.bf16.msra.mxu0 0
        %1723 = vmatprep.subr.bf16.mxu0 0
        %1724 = vmatpush1.bf16.msra.mxu0 0
        %1725 = vmatprep.subr.bf16.mxu0 0
        %1726 = vmatpush1.bf16.msra.mxu0 0
        %1727 = vmatprep.mubr.bf16.mxu0 0
        %1728 = vmatmul.mubr.bf16.gmra.mrb[0].mxu0 %v1690
        %v1729 = vpop.f32.mrb[0].mxu0
        %v1730 = vadd.f32 0.0, %v1729
        %v1731 = vpop.f32.mrb[0].mxu0
        %v1732 = vpop.f32.mrb[0].mxu0
        %v1733 = vpop.f32.mrb[0].mxu0
        %1734 = vdwg.mxu0
        %1735 = vrot.lane.b32.xlu0 %v754, 72
        %v1736 = vpop.permute.xlu0 %1735
        %1737 = vrot.lane.b32.xlu0 %v759, 72
        %v1738 = vpop.permute.xlu0 %1737
        %v1739 = vsel %vm761, %v1736, 0
        %v1741 = vsel %vm761, %v1738, 0
        %1743 = vmatprep.subr.mxu0 0.0
        %1744 = vmatpush1.xpose.msra.mxu0 %v1741
        %1745 = vmatprep.subr.mxu0 0.0
        %1746 = vmatpush1.xpose.msra.mxu0 0.0
        %1747 = vmatprep.subr.mxu0 0.0
        %1748 = vmatpush1.xpose.msra.mxu0 0.0
        %1749 = vmatprep.subr.mxu0 0.0
        %1750 = vmatpush1.xpose.msra.mxu0 0.0
        %1751 = vmatprep.subr.mxu0 0.0
        %1752 = vmatpush1.xpose.msra.mxu0 0.0
        %1753 = vmatprep.subr.mxu0 0.0
        %1754 = vmatpush1.xpose.msra.mxu0 0.0
        %1755 = vmatprep.subr.mxu0 0.0
        %1756 = vmatpush1.xpose.msra.mxu0 0.0
        %1757 = vmatprep.subr.mxu0 0.0
        %1758 = vmatpush1.xpose.msra.mxu0 0.0
        %1759 = vmatprep.subr.mxu0 0.0
        %1760 = vmatpush1.xpose.msra.mxu0 0.0
        %1761 = vmatprep.subr.mxu0 0.0
        %1762 = vmatpush1.xpose.msra.mxu0 0.0
        %1763 = vmatprep.subr.mxu0 0.0
        %1764 = vmatpush1.xpose.msra.mxu0 0.0
        %1765 = vmatprep.subr.mxu0 0.0
        %1766 = vmatpush1.xpose.msra.mxu0 0.0
        %1767 = vmatprep.subr.mxu0 0.0
        %1768 = vmatpush1.xpose.msra.mxu0 0.0
        %1769 = vmatprep.subr.mxu0 0.0
        %1770 = vmatpush1.xpose.msra.mxu0 0.0
        %1771 = vmatprep.subr.mxu0 0.0
        %1772 = vmatpush1.xpose.msra.mxu0 0.0
        %1773 = vmatprep.subr.mxu0 0.0
        %1774 = vmatpush1.xpose.msra.mxu0 0.0
        %1775 = vmatprep.subr.mxu0 0.0
        %1776 = vmatpush1.xpose.msra.mxu0 0.0
        %1777 = vmatprep.subr.mxu0 0.0
        %1778 = vmatpush1.xpose.msra.mxu0 0.0
        %1779 = vmatprep.subr.mxu0 0.0
        %1780 = vmatpush1.xpose.msra.mxu0 0.0
        %1781 = vmatprep.subr.mxu0 0.0
        %1782 = vmatpush1.xpose.msra.mxu0 0.0
        %1783 = vmatprep.subr.mxu0 0.0
        %1784 = vmatpush1.xpose.msra.mxu0 0.0
        %1785 = vmatprep.subr.mxu0 0.0
        %1786 = vmatpush1.xpose.msra.mxu0 0.0
        %1787 = vmatprep.subr.mxu0 0.0
        %1788 = vmatpush1.xpose.msra.mxu0 0.0
        %1789 = vmatprep.subr.mxu0 0.0
        %1790 = vmatpush1.xpose.msra.mxu0 0.0
        %1791 = vmatprep.subr.mxu0 0.0
        %1792 = vmatpush1.xpose.msra.mxu0 0.0
        %1793 = vmatprep.subr.mxu0 0.0
        %1794 = vmatpush1.xpose.msra.mxu0 0.0
        %1795 = vmatprep.subr.mxu0 0.0
        %1796 = vmatpush1.xpose.msra.mxu0 0.0
        %1797 = vmatprep.subr.mxu0 0.0
        %1798 = vmatpush1.xpose.msra.mxu0 0.0
        %1799 = vmatprep.subr.mxu0 0.0
        %1800 = vmatpush1.xpose.msra.mxu0 0.0
        %1801 = vmatprep.subr.mxu0 0.0
        %1802 = vmatpush1.xpose.msra.mxu0 0.0
        %1803 = vmatprep.subr.mxu0 0.0
        %1804 = vmatpush1.xpose.msra.mxu0 0.0
        %1805 = vmatprep.subr.mxu0 0.0
        %1806 = vmatpush1.xpose.msra.mxu0 0.0
        %1807 = vmatprep.mubr.f32.mxu0 0.0
        %1808 = vmatmul.mubr.f32.gmra.mrb[0].mxu0 %v1739
        %v1809 = vpop.f32.mrb[0].mxu0
        %v1810 = vadd.f32 0.0, %v1809
        %v1811 = vpop.f32.mrb[0].mxu0
        %1812 = vdwg.mxu0
        %v1813 = vmul.f32 %v1810, 0.35355338
        %v1814 = vsel %vm761, %v1813, -inf
        %1815 = vmax.xlane.f32.xlu0 %v1814
        %v1816 = vpop.xlane.xlu0 %1815
        %v1817 = vsub.f32 %v1813, %v1816
        %v1818 = vmul.f32 %v1817, 1.442695
        %v1819 = vpow.pop %v1818
        %v1820 = vsel %vm761, %v1819, 0.0
        %1821 = vadd.xlane.f32.xlu0 %v1820
        %v1822 = vpop.xlane.xlu0 %1821
        %v1823 = vrcp.pop %v1822
        %v1824 = vmul.f32 %v1819, %v1823
        %v1825 = vpack.c.bf16 %v1824, %v1824
        %1826 = vrot.lane.b32.xlu0 %v991, 72
        %v1827 = vpop.permute.xlu0 %1826
        %v1829 = vsel %vm761, %v1825, 0
        %v1832 = vsel %vm854, %v1827, 0
        %1834 = vmatprep.subr.bf16.mxu0 0
        %1835 = vmatpush1.bf16.msra.mxu0 %v1832
        %1836 = vmatprep.subr.bf16.mxu0 0
        %1837 = vmatpush1.bf16.msra.mxu0 0
        %1838 = vmatprep.subr.bf16.mxu0 0
        %1839 = vmatpush1.bf16.msra.mxu0 0
        %1840 = vmatprep.subr.bf16.mxu0 0
        %1841 = vmatpush1.bf16.msra.mxu0 0
        %1842 = vmatprep.subr.bf16.mxu0 0
        %1843 = vmatpush1.bf16.msra.mxu0 0
        %1844 = vmatprep.subr.bf16.mxu0 0
        %1845 = vmatpush1.bf16.msra.mxu0 0
        %1846 = vmatprep.subr.bf16.mxu0 0
        %1847 = vmatpush1.bf16.msra.mxu0 0
        %1848 = vmatprep.subr.bf16.mxu0 0
        %1849 = vmatpush1.bf16.msra.mxu0 0
        %1850 = vmatprep.subr.bf16.mxu0 0
        %1851 = vmatpush1.bf16.msra.mxu0 0
        %1852 = vmatprep.subr.bf16.mxu0 0
        %1853 = vmatpush1.bf16.msra.mxu0 0
        %1854 = vmatprep.subr.bf16.mxu0 0
        %1855 = vmatpush1.bf16.msra.mxu0 0
        %1856 = vmatprep.subr.bf16.mxu0 0
        %1857 = vmatpush1.bf16.msra.mxu0 0
        %1858 = vmatprep.subr.bf16.mxu0 0
        %1859 = vmatpush1.bf16.msra.mxu0 0
        %1860 = vmatprep.subr.bf16.mxu0 0
        %1861 = vmatpush1.bf16.msra.mxu0 0
        %1862 = vmatprep.subr.bf16.mxu0 0
        %1863 = vmatpush1.bf16.msra.mxu0 0
        %1864 = vmatprep.subr.bf16.mxu0 0
        %1865 = vmatpush1.bf16.msra.mxu0 0
        %1866 = vmatprep.mubr.bf16.mxu0 0
        %1867 = vmatmul.mubr.bf16.gmra.mrb[0].mxu0 %v1829
        %v1868 = vpop.f32.mrb[0].mxu0
        %v1869 = vadd.f32 0.0, %v1868
        %v1870 = vpop.f32.mrb[0].mxu0
        %v1871 = vpop.f32.mrb[0].mxu0
        %v1872 = vpop.f32.mrb[0].mxu0
        %1873 = vdwg.mxu0
        %1874 = vst.msk [vmem:[%s519] sm:$0xff] %vm761, %v849
        %1875 = vst.msk [vmem:[%s519 + $0x8] sm:$0xff] %vm761, %v987
        %1876 = vst.msk [vmem:[%s519 + $0x10] sm:$0xff] %vm761, %v1129
        %1877 = vst.msk [vmem:[%s519 + $0x18] sm:$0xff] %vm761, %v1268
        %1878 = vst.msk [vmem:[%s519 + $0x20] sm:$0xff] %vm761, %v1407
        %1879 = vst.msk [vmem:[%s519 + $0x28] sm:$0xff] %vm761, %v1546
        %1880 = vst.msk [vmem:[%s519 + $0x30] sm:$0xff] %vm761, %v1685
        %1881 = vst.msk [vmem:[%s519 + $0x38] sm:$0xff] %vm761, %v1824
        %1883 = vrot.lane.b32.xlu0 %v1035, 8
        %v1884 = vpop.permute.xlu0 %1883
        %1887 = vrot.lane.b32.xlu0 %v1174, 16
        %v1888 = vpop.permute.xlu0 %1887
        %1891 = vrot.lane.b32.xlu0 %v1313, 24
        %v1892 = vpop.permute.xlu0 %1891
        %1895 = vrot.lane.b32.xlu0 %v1452, 32
        %v1896 = vpop.permute.xlu0 %1895
        %1899 = vrot.lane.b32.xlu0 %v1591, 40
        %v1900 = vpop.permute.xlu0 %1899
        %1903 = vrot.lane.b32.xlu0 %v1730, 48
        %v1904 = vpop.permute.xlu0 %1903
        %1907 = vrot.lane.b32.xlu0 %v1869, 56
        %v1908 = vpop.permute.xlu0 %1907
        %v1910 = vsel %vm761, %v893, %v1884
        %vm1911 = vcmask 130048
        %v1912 = vsel %vm1911, %v1910, %v1888
        %vm1913 = vcmask 195584
        %v1914 = vsel %vm1913, %v1912, %v1892
        %vm1915 = vcmask 261120
        %v1916 = vsel %vm1915, %v1914, %v1896
        %vm1917 = vcmask 326656
        %v1918 = vsel %vm1917, %v1916, %v1900
        %vm1919 = vcmask 392192
        %v1920 = vsel %vm1919, %v1918, %v1904
        %vm1921 = vcmask 457728
        %v1922 = vsel %vm1921, %v1920, %v1908
        %v1923 = vpack.c.bf16 %v1922, %v1922
        %v1924 = vld [vmem:[#allocation15] sm:$0xf]
        %v1925 = vld [vmem:[#allocation15 + $0x4] sm:$0xf]
        %v1926 = vld [vmem:[#allocation15 + $0x8] sm:$0xf]
        %v1927 = vld [vmem:[#allocation15 + $0xc] sm:$0xf]
        %v1928 = vld [vmem:[#allocation15 + $0x10] sm:$0xf]
        %v1929 = vld [vmem:[#allocation15 + $0x14] sm:$0xf]
        %v1930 = vld [vmem:[#allocation15 + $0x18] sm:$0xf]
        %v1931 = vld [vmem:[#allocation15 + $0x1c] sm:$0xf]
        %v1932 = vld [vmem:[#allocation16] sm:$0x1]
        %v1934 = vlaneseq
        %v1935 = vshrl.u32 %v1934, 7
        %v1936 = vsub.s32 0, %v1935
        %v1937 = vrot.slane %v1932, %v1936
        %v1947 = vunpack.c.l.b16 %v1924
        %v1948 = vunpack.c.l.b16 %v1925
        %v1949 = vunpack.c.l.b16 %v1926
        %v1950 = vunpack.c.l.b16 %v1927
        %v1951 = vunpack.c.l.b16 %v1928
        %v1952 = vunpack.c.l.b16 %v1929
        %v1953 = vunpack.c.l.b16 %v1930
        %v1954 = vunpack.c.l.b16 %v1931
        %v1955 = vpack.c.b16 %v1948, %v1947
        %v1956 = vpack.c.b16 %v1950, %v1949
        %v1957 = vpack.c.b16 %v1952, %v1951
        %v1958 = vpack.c.b16 %v1954, %v1953
        %v1964 = vsel %vm715, %v1923, 0
        %1966 = vmatprep.subr.bf16.mxu0 0
        %1967 = vmatpush1.bf16.msra.mxu0 %v1955
        %1968 = vmatprep.subr.bf16.mxu0 0
        %1969 = vmatpush1.bf16.msra.mxu0 %v1956
        %1970 = vmatprep.subr.bf16.mxu0 0
        %1971 = vmatpush1.bf16.msra.mxu0 %v1957
        %1972 = vmatprep.subr.bf16.mxu0 0
        %1973 = vmatpush1.bf16.msra.mxu0 %v1958
        %1974 = vmatprep.subr.bf16.mxu0 0
        %1975 = vmatpush1.bf16.msra.mxu0 0
        %1976 = vmatprep.subr.bf16.mxu0 0
        %1977 = vmatpush1.bf16.msra.mxu0 0
        %1978 = vmatprep.subr.bf16.mxu0 0
        %1979 = vmatpush1.bf16.msra.mxu0 0
        %1980 = vmatprep.subr.bf16.mxu0 0
        %1981 = vmatpush1.bf16.msra.mxu0 0
        %1982 = vmatprep.subr.bf16.mxu0 0
        %1983 = vmatpush1.bf16.msra.mxu0 0
        %1984 = vmatprep.subr.bf16.mxu0 0
        %1985 = vmatpush1.bf16.msra.mxu0 0
        %1986 = vmatprep.subr.bf16.mxu0 0
        %1987 = vmatpush1.bf16.msra.mxu0 0
        %1988 = vmatprep.subr.bf16.mxu0 0
        %1989 = vmatpush1.bf16.msra.mxu0 0
        %1990 = vmatprep.subr.bf16.mxu0 0
        %1991 = vmatpush1.bf16.msra.mxu0 0
        %1992 = vmatprep.subr.bf16.mxu0 0
        %1993 = vmatpush1.bf16.msra.mxu0 0
        %1994 = vmatprep.subr.bf16.mxu0 0
        %1995 = vmatpush1.bf16.msra.mxu0 0
        %1996 = vmatprep.subr.bf16.mxu0 0
        %1997 = vmatpush1.bf16.msra.mxu0 0
        %1998 = vmatprep.mubr.bf16.mxu0 0
        %1999 = vmatmul.mubr.bf16.gmra.mrb[0].mxu0 %v1964
        %v2000 = vpop.f32.mrb[0].mxu0
        %v2001 = vadd.f32 %v1937, %v2000
        %v2002 = vpop.f32.mrb[0].mxu0
        %v2003 = vpop.f32.mrb[0].mxu0
        %v2004 = vpop.f32.mrb[0].mxu0
        %2005 = vdwg.mxu0
        %2006 = vst.msk [vmem:[%s512] sm:$0xff] %vm715, %v2001
        %s2007 = sand.u32 %s243, 1
        %s2008 = scalar_lea.sflag [#allocation6], %s2007
        %s2009 = sand.u32 %s243, 1
        %s2010 = smul.addr %s2009, 8
        %s2011 = scalar_lea.vmem [#allocation18], %s2010
        %s2012 = sand.u32 %s271, 1
        %s2013 = scalar_lea.sflag [#allocation20], %s2012
        %s2014 = sand.u32 %s271, 1
        %s2015 = smul.addr %s2014, 64
        %s2016 = scalar_lea.vmem [#allocation19], %s2015
        // Predicated region
        $region89: #{tpu_custom_call.1} parent=51 // pred_check
          %p2017 = pneg %p253
        $region90: #{tpu_custom_call.1} parent=51 // pred_check_branch
          %2019 = sbr.rel (%p2017) target = $region92
        $region91: #{tpu_custom_call.1} parent=51 // pred_region
          %s2021 = ssub.s32 128, 128
          %2022 = vsyncadd %s2008, %s2021
          %s2023 = sadd.s32 %s41, %s40
          %s2024 = smul.addr %s2023, 128
          %s2025 = scalar_lea.hbm %s8, %s2024
          %s2027 = sshll.u32 %s2011, 4
          %s2028 = int_to_ptr.vmem [resolvable:$true] %s2027
          %2030 = dma.vmem_to_hbm [thread:$0]  %s2028, 128, %s2025, %s2008
        $region92: #{tpu_custom_call.1} parent=51 // pred_fallthru
          _
        // Predicated region
        $region93: #{tpu_custom_call.1} parent=51 // pred_check
          %p2031 = pneg %p281
        $region94: #{tpu_custom_call.1} parent=51 // pred_check_branch
          %2033 = sbr.rel (%p2031) target = $region96
        $region95: #{tpu_custom_call.1} parent=51 // pred_region
          %s2035 = ssub.s32 1024, 1024
          %2036 = vsyncadd %s2013, %s2035
          %s2037 = smul.addr %s40, 8
          %s2038 = sadd.s32 %s41, %s2037
          %s2039 = smul.addr %s2038, 128
          %s2040 = scalar_lea.hbm %s9, %s2039
          %s2041 = sshll.u32 %s2016, 4
          %s2042 = int_to_ptr.vmem [resolvable:$true] %s2041
          %2047 = dma.vmem_to_hbm [thread:$0]  %s2042, 1024, %s2040, %s2013, 128, 128, 8
        $region96: #{tpu_custom_call.1} parent=51 // pred_fallthru
          _
      $region52: #{tpu_custom_call.1} parent=5 // pred_fallthru
        _
      %p2048 = scmp.le.s32.totalorder 2, %s31
      // Predicated region
      $region97: #{tpu_custom_call.1} parent=5 // pred_check
        %p2049 = pneg %p2048
      $region98: #{tpu_custom_call.1} parent=5 // pred_check_branch
        %2051 = sbr.rel (%p2049) target = $region100
      $region99: #{tpu_custom_call.1} parent=5 // pred_region
        %s2052 = ssub.s32 %s31, 2
        // Predicated region
        $region101: #{tpu_custom_call.1} parent=99 // pred_check
          %p2053 = pneg %p259
        $region102: #{tpu_custom_call.1} parent=99 // pred_check_branch
          %2055 = sbr.rel (%p2053) target = $region104
        $region103: #{tpu_custom_call.1} parent=99 // pred_region
          %s2056 = sand.u32 %s244, 1
          %s2057 = scalar_lea.sflag [#allocation6], %s2056
          %s2058 = sand.u32 %s244, 1
          %s2059 = smul.addr %s2058, 8
          %s2060 = scalar_lea.vmem [#allocation18], %s2059
          %2061 = dma.done %s2057, 128
        $region104: #{tpu_custom_call.1} parent=99 // pred_fallthru
          _
        // Predicated region
        $region105: #{tpu_custom_call.1} parent=99 // pred_check
          %p2062 = pneg %p287
        $region106: #{tpu_custom_call.1} parent=99 // pred_check_branch
          %2064 = sbr.rel (%p2062) target = $region108
        $region107: #{tpu_custom_call.1} parent=99 // pred_region
          %s2065 = sand.u32 %s272, 1
          %s2066 = scalar_lea.sflag [#allocation20], %s2065
          %s2067 = sand.u32 %s272, 1
          %s2068 = smul.addr %s2067, 64
          %s2069 = scalar_lea.vmem [#allocation19], %s2068
          %2070 = dma.done %s2066, 1024
        $region108: #{tpu_custom_call.1} parent=99 // pred_fallthru
          _
      $region100: #{tpu_custom_call.1} parent=5 // pred_fallthru
        _
    $region6: #{tpu_custom_call.1} parent=1 // loop_footer
      %s35 = sadd.s32 1, %s31
    $region7: #{tpu_custom_call.1} parent=1 // loop_footer_branch
      %30 = sbr.rel target = $region3
    $region8: #{tpu_custom_call.1} parent=1 // loop_exit
      _
    %2071 = vsyncpa [#allocation5], 1
    %s2072 = scalar_lea.sflag [#allocation5], 1
    %2073 = vsyncpa %s2072, 1
    %2074 = vsyncpa [#allocation8], 1
    %s2075 = scalar_lea.sflag [#allocation8], 1
    %2076 = vsyncpa %s2075, 1
    %2077 = vsyncpa [#allocation11], 1
    %2078 = vsyncpa [#allocation14], 1
    %2079 = vsyncpa [#allocation17], 1
    %2080 = vsyncpa [#allocation6], 1
    %s2081 = scalar_lea.sflag [#allocation6], 1
    %2082 = vsyncpa %s2081, 1
    %2083 = vsyncpa [#allocation20], 1
    %s2084 = scalar_lea.sflag [#allocation20], 1
    %2085 = vsyncpa %s2084, 1

</llo_original>
